<compile_context>
chip_gen: v7x
topology: tpu7x:2x2x1
jax: 0.10.0
libtpu: 0.0.40
codegen_flags: <defaults>
</compile_context>

<pallas_src>
import functools

import jax
import jax.numpy as jnp
from jax.experimental import pallas as pl
from jax.experimental.pallas import tpu as pltpu

HIDDEN = 256
OUT_LANES = 128  # lane-dense output width; cols 0/1 carry q1/q2, rest are zero-padding


def _critic_kernel(ss_ref,
                   w14_ref, b14_ref,
                   w25_ref, b25_ref,
                   w36_ref, b36_ref,
                   out_ref):
    ss = ss_ref[...]  # (TB, 2*state_dim), float32

    # Layer 1 (both heads fused along N): (TB, 2sd) @ (2sd, 512) -> (TB, 512)
    h = jnp.dot(ss, w14_ref[...], preferred_element_type=jnp.float32) + b14_ref[...]
    h = jnp.maximum(h, 0.0)

    # Layer 2 (block-diagonal -> heads stay independent): (TB, 512) @ (512, 512)
    h = jnp.dot(h, w25_ref[...], preferred_element_type=jnp.float32) + b25_ref[...]
    h = jnp.maximum(h, 0.0)

    # Layer 3, lane-dense output: (TB, 512) @ (512, 128) -> (TB, 128)
    # column 0 = q1, column 1 = q2, remaining columns are zeros (padding).
    out_ref[...] = jnp.dot(h, w36_ref[...], preferred_element_type=jnp.float32) + b36_ref[...]


def init_critic_params(key, state_dim, dtype=jnp.float32):
    """Deterministic PyTorch-style uniform(-1/sqrt(fan_in), 1/sqrt(fan_in)) init.

    Weights are stored as [in_features, out_features]; biases as [1, out_features].
    """
    dims = [
        (2 * state_dim, HIDDEN),  # l1
        (HIDDEN, HIDDEN),         # l2
        (HIDDEN, 1),              # l3
        (2 * state_dim, HIDDEN),  # l4
        (HIDDEN, HIDDEN),         # l5
        (HIDDEN, 1),              # l6
    ]
    params = []
    for (fan_in, fan_out) in dims:
        key, kw, kb = jax.random.split(key, 3)
        bound = 1.0 / jnp.sqrt(jnp.asarray(fan_in, dtype))
        w = jax.random.uniform(kw, (fan_in, fan_out), dtype, -bound, bound)
        b = jax.random.uniform(kb, (1, fan_out), dtype, -bound, bound)
        params.append((w, b))
    return params


def _pack_params(params):
    """Fuse the 6 per-layer params into 3 wide/block-diagonal f32 weights."""
    (w1, b1), (w2, b2), (w3, b3), (w4, b4), (w5, b5), (w6, b6) = params
    f32 = jnp.float32
    H = w2.shape[0]

    w14 = jnp.concatenate([w1, w4], axis=1).astype(f32)            # (2sd, 2H)
    b14 = jnp.concatenate([b1, b4], axis=1).astype(f32)            # (1, 2H)

    z = jnp.zeros((H, H), f32)
    w25 = jnp.concatenate(
        [jnp.concatenate([w2.astype(f32), z], axis=1),
         jnp.concatenate([z, w5.astype(f32)], axis=1)], axis=0)    # (2H, 2H)
    b25 = jnp.concatenate([b2, b5], axis=1).astype(f32)            # (1, 2H)

    w36 = jnp.zeros((2 * H, OUT_LANES), f32)
    w36 = w36.at[:H, 0:1].set(w3.astype(f32))
    w36 = w36.at[H:, 1:2].set(w6.astype(f32))                      # (2H, 128)
    b36 = jnp.zeros((1, OUT_LANES), f32)
    b36 = b36.at[:, 0:1].set(b3.astype(f32))
    b36 = b36.at[:, 1:2].set(b6.astype(f32))                       # (1, 128)

    return w14, b14, w25, b25, w36, b36


@functools.partial(jax.jit, static_argnames=("batch_tile",))
def critic_forward(state, next_state, params, batch_tile=256):
    """Pallas equivalent of Critic.forward -> (q1, q2)."""
    ss = jnp.concatenate([state, next_state], axis=1).astype(jnp.float32)
    B, two_sd = ss.shape

    w14, b14, w25, b25, w36, b36 = _pack_params(params)

    # Pad batch to a multiple of the tile (padded rows are computed and discarded).
    pad_B = ((B + batch_tile - 1) // batch_tile) * batch_tile
    if pad_B != B:
        ss = jnp.pad(ss, ((0, pad_B - B), (0, 0)))

    batched = lambda i: (i, 0)   # tiled over the batch grid axis
    rep = lambda i: (0, 0)       # constant index_map -> stays VMEM-resident

    in_specs = [
        pl.BlockSpec((batch_tile, two_sd), batched),
        pl.BlockSpec(w14.shape, rep),
        pl.BlockSpec(b14.shape, rep),
        pl.BlockSpec(w25.shape, rep),
        pl.BlockSpec(b25.shape, rep),
        pl.BlockSpec(w36.shape, rep),
        pl.BlockSpec(b36.shape, rep),
    ]
    out_specs = pl.BlockSpec((batch_tile, OUT_LANES), batched)
    out_shape = jax.ShapeDtypeStruct((pad_B, OUT_LANES), jnp.float32)

    out = pl.pallas_call(
        _critic_kernel,
        out_shape=out_shape,
        grid_spec=pltpu.PrefetchScalarGridSpec(
            num_scalar_prefetch=0,
            grid=(pad_B // batch_tile,),
            in_specs=in_specs,
            out_specs=out_specs,
        ),
        compiler_params=pltpu.CompilerParams(
            dimension_semantics=("parallel",),
        ),
    )(ss, w14, b14, w25, b25, w36, b36)

    q1 = out[:B, 0:1]
    q2 = out[:B, 1:2]
    return q1, q2


def critic_forward_ref(state, next_state, params):
    """Plain-JAX reference for correctness checking."""
    ss = jnp.concatenate([state, next_state], axis=1).astype(jnp.float32)
    (w1, b1), (w2, b2), (w3, b3), (w4, b4), (w5, b5), (w6, b6) = params
    h1 = jax.nn.relu(ss @ w1 + b1)
    h1 = jax.nn.relu(h1 @ w2 + b2)
    q1 = h1 @ w3 + b3
    h2 = jax.nn.relu(ss @ w4 + b4)
    h2 = jax.nn.relu(h2 @ w5 + b5)
    q2 = h2 @ w6 + b6
    return q1, q2


if __name__ == "__main__":
    state_dim = 16
    batch = 8   # smaller than batch_tile: exercised via zero-padding path

    key = jax.random.PRNGKey(0)
    kp, ks, kn = jax.random.split(key, 3)

    params = init_critic_params(kp, state_dim)
    state = jax.random.normal(ks, (batch, state_dim), jnp.float32)
    next_state = jax.random.normal(kn, (batch, state_dim), jnp.float32)

    q1, q2 = critic_forward(state, next_state, params)
    jax.block_until_ready((q1, q2))

    q1_ref, q2_ref = critic_forward_ref(state, next_state, params)
    assert q1.shape == (batch, 1) and q2.shape == (batch, 1)
    assert jnp.allclose(q1, q1_ref, atol=1e-5, rtol=1e-5)
    assert jnp.allclose(q2, q2_ref, atol=1e-5, rtol=1e-5)

    print("KERNEL_OK")
</pallas_src>

<mosaic_0001>
module attributes {stable_mosaic.version = 11 : i64} {
  func.func @_critic_kernel(%arg0: i32, %arg1: memref<256x32xf32, #tpu.memory_space<vmem>>, %arg2: memref<32x512xf32, #tpu.memory_space<vmem>>, %arg3: memref<1x512xf32, #tpu.memory_space<vmem>>, %arg4: memref<512x512xf32, #tpu.memory_space<vmem>>, %arg5: memref<1x512xf32, #tpu.memory_space<vmem>>, %arg6: memref<512x128xf32, #tpu.memory_space<vmem>>, %arg7: memref<1x128xf32, #tpu.memory_space<vmem>>, %arg8: memref<256x128xf32, #tpu.memory_space<vmem>>) attributes {dimension_semantics = [#tpu.dimension_semantics<parallel>], iteration_bounds = array<i64: 1>, scalar_prefetch = 0 : i64, scratch_operands = 0 : i64, tpu.core_type = #tpu.core_type<tc>, window_params = [{transform_indices = @transform_0, window_bounds = array<i64: 256, 32>}, {pipeline_mode = #tpu.pipeline_mode<synchronous>, transform_indices = @transform_1, window_bounds = array<i64: 32, 512>}, {pipeline_mode = #tpu.pipeline_mode<synchronous>, transform_indices = @transform_2, window_bounds = array<i64: 1, 512>}, {pipeline_mode = #tpu.pipeline_mode<synchronous>, transform_indices = @transform_3, window_bounds = array<i64: 512, 512>}, {pipeline_mode = #tpu.pipeline_mode<synchronous>, transform_indices = @transform_4, window_bounds = array<i64: 1, 512>}, {pipeline_mode = #tpu.pipeline_mode<synchronous>, transform_indices = @transform_5, window_bounds = array<i64: 512, 128>}, {pipeline_mode = #tpu.pipeline_mode<synchronous>, transform_indices = @transform_6, window_bounds = array<i64: 1, 128>}, {transform_indices = @transform_7, window_bounds = array<i64: 256, 128>}]} {
    %c0 = arith.constant 0 : index
    %c0_0 = arith.constant 0 : index
    %0 = vector.load %arg1[%c0, %c0_0] : memref<256x32xf32, #tpu.memory_space<vmem>>, vector<256x32xf32>
    %c0_1 = arith.constant 0 : index
    %c0_2 = arith.constant 0 : index
    %1 = vector.load %arg2[%c0_1, %c0_2] : memref<32x512xf32, #tpu.memory_space<vmem>>, vector<32x512xf32>
    %cst = arith.constant dense<0.000000e+00> : vector<256x512xf32>
    %2 = tpu.matmul %0, %1, %cst {dimension_numbers = #tpu.dot_dimension_numbers<[1], [0], [0], [1], [0, 0, 1, 1], [], []>} : vector<256x32xf32>, vector<32x512xf32>, vector<256x512xf32> -> vector<256x512xf32>
    %c0_3 = arith.constant 0 : index
    %c0_4 = arith.constant 0 : index
    %3 = vector.load %arg3[%c0_3, %c0_4] : memref<1x512xf32, #tpu.memory_space<vmem>>, vector<1x512xf32>
    %4 = vector.broadcast %3 : vector<1x512xf32> to vector<256x512xf32>
    %5 = arith.addf %2, %4 : vector<256x512xf32>
    %cst_5 = arith.constant 0.000000e+00 : f32
    %6 = vector.broadcast %cst_5 : f32 to vector<256x512xf32>
    %7 = arith.maximumf %5, %6 : vector<256x512xf32>
    %c0_6 = arith.constant 0 : index
    %c0_7 = arith.constant 0 : index
    %8 = vector.load %arg4[%c0_6, %c0_7] : memref<512x512xf32, #tpu.memory_space<vmem>>, vector<512x512xf32>
    %cst_8 = arith.constant dense<0.000000e+00> : vector<256x512xf32>
    %9 = tpu.matmul %7, %8, %cst_8 {dimension_numbers = #tpu.dot_dimension_numbers<[1], [0], [0], [1], [0, 0, 1, 1], [], []>} : vector<256x512xf32>, vector<512x512xf32>, vector<256x512xf32> -> vector<256x512xf32>
    %c0_9 = arith.constant 0 : index
    %c0_10 = arith.constant 0 : index
    %10 = vector.load %arg5[%c0_9, %c0_10] : memref<1x512xf32, #tpu.memory_space<vmem>>, vector<1x512xf32>
    %11 = vector.broadcast %10 : vector<1x512xf32> to vector<256x512xf32>
    %12 = arith.addf %9, %11 : vector<256x512xf32>
    %cst_11 = arith.constant 0.000000e+00 : f32
    %13 = vector.broadcast %cst_11 : f32 to vector<256x512xf32>
    %14 = arith.maximumf %12, %13 : vector<256x512xf32>
    %c0_12 = arith.constant 0 : index
    %c0_13 = arith.constant 0 : index
    %15 = vector.load %arg6[%c0_12, %c0_13] : memref<512x128xf32, #tpu.memory_space<vmem>>, vector<512x128xf32>
    %cst_14 = arith.constant dense<0.000000e+00> : vector<256x128xf32>
    %16 = tpu.matmul %14, %15, %cst_14 {dimension_numbers = #tpu.dot_dimension_numbers<[1], [0], [0], [1], [0, 0, 1, 1], [], []>} : vector<256x512xf32>, vector<512x128xf32>, vector<256x128xf32> -> vector<256x128xf32>
    %c0_15 = arith.constant 0 : index
    %c0_16 = arith.constant 0 : index
    %17 = vector.load %arg7[%c0_15, %c0_16] : memref<1x128xf32, #tpu.memory_space<vmem>>, vector<1x128xf32>
    %18 = vector.broadcast %17 : vector<1x128xf32> to vector<256x128xf32>
    %19 = arith.addf %16, %18 : vector<256x128xf32>
    %c0_17 = arith.constant 0 : index
    %c0_18 = arith.constant 0 : index
    %20 = vector.load %arg8[%c0_17, %c0_18] : memref<256x128xf32, #tpu.memory_space<vmem>>, vector<256x128xf32>
    tpu.vector_store %arg8[%c0_17, %c0_18], %19 {strides = array<i32>} : memref<256x128xf32, #tpu.memory_space<vmem>>, vector<256x128xf32>,
    return
  }
  func.func @transform_0(%arg0: i32) -> (i32, i32) {
    %c0_i32 = arith.constant 0 : i32
    %c0_i32_0 = arith.constant 0 : i32
    return %arg0, %c0_i32 : i32, i32
  }
  func.func @transform_1(%arg0: i32) -> (i32, i32) {
    %c0_i32 = arith.constant 0 : i32
    %c0_i32_0 = arith.constant 0 : i32
    %c0_i32_1 = arith.constant 0 : i32
    return %c0_i32, %c0_i32_0 : i32, i32
  }
  func.func @transform_2(%arg0: i32) -> (i32, i32) {
    %c0_i32 = arith.constant 0 : i32
    %c0_i32_0 = arith.constant 0 : i32
    %c0_i32_1 = arith.constant 0 : i32
    return %c0_i32, %c0_i32_0 : i32, i32
  }
  func.func @transform_3(%arg0: i32) -> (i32, i32) {
    %c0_i32 = arith.constant 0 : i32
    %c0_i32_0 = arith.constant 0 : i32
    %c0_i32_1 = arith.constant 0 : i32
    return %c0_i32, %c0_i32_0 : i32, i32
  }
  func.func @transform_4(%arg0: i32) -> (i32, i32) {
    %c0_i32 = arith.constant 0 : i32
    %c0_i32_0 = arith.constant 0 : i32
    %c0_i32_1 = arith.constant 0 : i32
    return %c0_i32, %c0_i32_0 : i32, i32
  }
  func.func @transform_5(%arg0: i32) -> (i32, i32) {
    %c0_i32 = arith.constant 0 : i32
    %c0_i32_0 = arith.constant 0 : i32
    %c0_i32_1 = arith.constant 0 : i32
    return %c0_i32, %c0_i32_0 : i32, i32
  }
  func.func @transform_6(%arg0: i32) -> (i32, i32) {
    %c0_i32 = arith.constant 0 : i32
    %c0_i32_0 = arith.constant 0 : i32
    %c0_i32_1 = arith.constant 0 : i32
    return %c0_i32, %c0_i32_0 : i32, i32
  }
  func.func @transform_7(%arg0: i32) -> (i32, i32) {
    %c0_i32 = arith.constant 0 : i32
    %c0_i32_0 = arith.constant 0 : i32
    return %arg0, %c0_i32 : i32, i32
  }
}

</mosaic_0001>

<llo_original>
// kernel: critic_forward.1
$region0: #{critic_forward.1}
  #allocation0 [shape = 'u32[]', space=smem, size = 0x4, offset = 0x4, fixed_abs, tag = 'smem constant byte address 0x4 - core index']
  #allocation1 [shape = 'u32[144,128]{1,0:T(1,128)}', space=vmem, size = 0x12000, scoped, tag = 'internal scratch']
  %s0 = inlined_call_operand.vmem [shape: f32[256,32], index: 0, kind: input, shape index: {}]
  %s1 = inlined_call_operand.vmem [shape: f32[32,512], index: 1, kind: input, shape index: {}]
  %s2 = inlined_call_operand.vmem [shape: f32[1,512], index: 2, kind: input, shape index: {}]
  %s3 = inlined_call_operand.vmem [shape: f32[512,512], index: 3, kind: input, shape index: {}]
  %s4 = inlined_call_operand.vmem [shape: f32[1,512], index: 4, kind: input, shape index: {}]
  %s5 = inlined_call_operand.vmem [shape: f32[512,128], index: 5, kind: input, shape index: {}]
  %s6 = inlined_call_operand.vmem [shape: f32[1,128], index: 6, kind: input, shape index: {}]
  %s7 = inlined_call_operand.vmem [shape: f32[256,128], index: 7, kind: output, shape index: {}]
  %s8 = sld [smem:[#allocation0]]
  $region38: #{critic_forward.1} parent=0
    _
  %s10 = ssub.s32 1, %s8
  %s11 = scalar_select 0, %s10, %s8
  // Predicated region
  $region2: #{critic_forward.1} parent=0 // pred_check
    _
  $region3: #{critic_forward.1} parent=0 // pred_check_branch
    %13 = sbr.rel (0) target = $region5
  $region4: #{critic_forward.1} parent=0 // pred_region
    _
  $region5: #{critic_forward.1} parent=0 // pred_fallthru
    _
  // Predicated region
  $region6: #{critic_forward.1} parent=0 // pred_check
    _
  $region7: #{critic_forward.1} parent=0 // pred_check_branch
    %15 = sbr.rel (0) target = $region9
  $region8: #{critic_forward.1} parent=0 // pred_region
    _
  $region9: #{critic_forward.1} parent=0 // pred_fallthru
    _
  // Predicated region
  $region10: #{critic_forward.1} parent=0 // pred_check
    _
  $region11: #{critic_forward.1} parent=0 // pred_check_branch
    %17 = sbr.rel (0) target = $region13
  $region12: #{critic_forward.1} parent=0 // pred_region
    _
  $region13: #{critic_forward.1} parent=0 // pred_fallthru
    _
  // Predicated region
  $region14: #{critic_forward.1} parent=0 // pred_check
    _
  $region15: #{critic_forward.1} parent=0 // pred_check_branch
    %19 = sbr.rel (0) target = $region17
  $region16: #{critic_forward.1} parent=0 // pred_region
    _
  $region17: #{critic_forward.1} parent=0 // pred_fallthru
    _
  // Predicated region
  $region18: #{critic_forward.1} parent=0 // pred_check
    _
  $region19: #{critic_forward.1} parent=0 // pred_check_branch
    %21 = sbr.rel (0) target = $region21
  $region20: #{critic_forward.1} parent=0 // pred_region
    _
  $region21: #{critic_forward.1} parent=0 // pred_fallthru
    _
  // Predicated region
  $region22: #{critic_forward.1} parent=0 // pred_check
    _
  $region23: #{critic_forward.1} parent=0 // pred_check_branch
    %23 = sbr.rel (0) target = $region25
  $region24: #{critic_forward.1} parent=0 // pred_region
    _
  $region25: #{critic_forward.1} parent=0 // pred_fallthru
    _
  // Predicated region
  $region26: #{critic_forward.1} parent=0 // pred_check
    _
  $region27: #{critic_forward.1} parent=0 // pred_check_branch
    %25 = sbr.rel (0) target = $region29
  $region28: #{critic_forward.1} parent=0 // pred_region
    _
  $region29: #{critic_forward.1} parent=0 // pred_fallthru
    _
  %v26 = vld [vmem:[%s0] sm:$0xff]
  %v27 = vld [vmem:[%s0 + $0x8] sm:$0xff]
  %v28 = vld [vmem:[%s0 + $0x10] sm:$0xff]
  %v29 = vld [vmem:[%s0 + $0x18] sm:$0xff]
  %v30 = vld [vmem:[%s0 + $0x20] sm:$0xff]
  %v31 = vld [vmem:[%s0 + $0x28] sm:$0xff]
  %v32 = vld [vmem:[%s0 + $0x30] sm:$0xff]
  %v33 = vld [vmem:[%s0 + $0x38] sm:$0xff]
  %v34 = vld [vmem:[%s0 + $0x40] sm:$0xff]
  %v35 = vld [vmem:[%s0 + $0x48] sm:$0xff]
  %v36 = vld [vmem:[%s0 + $0x50] sm:$0xff]
  %v37 = vld [vmem:[%s0 + $0x58] sm:$0xff]
  %v38 = vld [vmem:[%s0 + $0x60] sm:$0xff]
  %v39 = vld [vmem:[%s0 + $0x68] sm:$0xff]
  %v40 = vld [vmem:[%s0 + $0x70] sm:$0xff]
  %v41 = vld [vmem:[%s0 + $0x78] sm:$0xff]
  %v42 = vld [vmem:[%s0 + $0x80] sm:$0xff]
  %v43 = vld [vmem:[%s0 + $0x88] sm:$0xff]
  %v44 = vld [vmem:[%s0 + $0x90] sm:$0xff]
  %v45 = vld [vmem:[%s0 + $0x98] sm:$0xff]
  %v46 = vld [vmem:[%s0 + $0xa0] sm:$0xff]
  %v47 = vld [vmem:[%s0 + $0xa8] sm:$0xff]
  %v48 = vld [vmem:[%s0 + $0xb0] sm:$0xff]
  %v49 = vld [vmem:[%s0 + $0xb8] sm:$0xff]
  %v50 = vld [vmem:[%s0 + $0xc0] sm:$0xff]
  %v51 = vld [vmem:[%s0 + $0xc8] sm:$0xff]
  %v52 = vld [vmem:[%s0 + $0xd0] sm:$0xff]
  %v53 = vld [vmem:[%s0 + $0xd8] sm:$0xff]
  %v54 = vld [vmem:[%s0 + $0xe0] sm:$0xff]
  %v55 = vld [vmem:[%s0 + $0xe8] sm:$0xff]
  %v56 = vld [vmem:[%s0 + $0xf0] sm:$0xff]
  %v57 = vld [vmem:[%s0 + $0xf8] sm:$0xff]
  %v58 = vld [vmem:[%s1] sm:$0xff]
  %v59 = vld [vmem:[%s1 + $0x8] sm:$0xff]
  %v60 = vld [vmem:[%s1 + $0x10] sm:$0xff]
  %v61 = vld [vmem:[%s1 + $0x18] sm:$0xff]
  %v62 = vld [vmem:[%s1 + $0x20] sm:$0xff]
  %v63 = vld [vmem:[%s1 + $0x28] sm:$0xff]
  %v64 = vld [vmem:[%s1 + $0x30] sm:$0xff]
  %v65 = vld [vmem:[%s1 + $0x38] sm:$0xff]
  %v66 = vld [vmem:[%s1 + $0x40] sm:$0xff]
  %v67 = vld [vmem:[%s1 + $0x48] sm:$0xff]
  %v68 = vld [vmem:[%s1 + $0x50] sm:$0xff]
  %v69 = vld [vmem:[%s1 + $0x58] sm:$0xff]
  %v70 = vld [vmem:[%s1 + $0x60] sm:$0xff]
  %v71 = vld [vmem:[%s1 + $0x68] sm:$0xff]
  %v72 = vld [vmem:[%s1 + $0x70] sm:$0xff]
  %v73 = vld [vmem:[%s1 + $0x78] sm:$0xff]
  %v74 = vld [vmem:[%s2] sm:$0xf]
  %v76 = vlaneseq
  %v77 = vshrl.u32 %v76, 7
  %v78 = vsub.s32 0, %v77
  %v79 = vrot.slane %v74, %v78
  %v80 = vlaneseq
  %v81 = vshrl.u32 %v80, 7
  %v82 = vsub.s32 1, %v81
  %v83 = vrot.slane %v74, %v82
  %v84 = vlaneseq
  %v85 = vshrl.u32 %v84, 7
  %v86 = vsub.s32 2, %v85
  %v87 = vrot.slane %v74, %v86
  %v88 = vlaneseq
  %v89 = vshrl.u32 %v88, 7
  %v90 = vsub.s32 3, %v89
  %v91 = vrot.slane %v74, %v90
  %vm96 = vcmask 261120
  %v98 = vsel %vm96, %v26, 0
  %v101 = vsel %vm96, %v27, 0
  %v104 = vsel %vm96, %v28, 0
  %v107 = vsel %vm96, %v29, 0
  %v110 = vsel %vm96, %v30, 0
  %v113 = vsel %vm96, %v31, 0
  %v116 = vsel %vm96, %v32, 0
  %v119 = vsel %vm96, %v33, 0
  %v122 = vsel %vm96, %v34, 0
  %v125 = vsel %vm96, %v35, 0
  %v128 = vsel %vm96, %v36, 0
  %v131 = vsel %vm96, %v37, 0
  %v134 = vsel %vm96, %v38, 0
  %v137 = vsel %vm96, %v39, 0
  %v140 = vsel %vm96, %v40, 0
  %v143 = vsel %vm96, %v41, 0
  %v146 = vsel %vm96, %v42, 0
  %v149 = vsel %vm96, %v43, 0
  %v152 = vsel %vm96, %v44, 0
  %v155 = vsel %vm96, %v45, 0
  %v158 = vsel %vm96, %v46, 0
  %v161 = vsel %vm96, %v47, 0
  %v164 = vsel %vm96, %v48, 0
  %v167 = vsel %vm96, %v49, 0
  %v170 = vsel %vm96, %v50, 0
  %v173 = vsel %vm96, %v51, 0
  %v176 = vsel %vm96, %v52, 0
  %v179 = vsel %vm96, %v53, 0
  %v182 = vsel %vm96, %v54, 0
  %v185 = vsel %vm96, %v55, 0
  %v188 = vsel %vm96, %v56, 0
  %v191 = vsel %vm96, %v57, 0
  %193 = vmatprep.subr.mxu0 %v59
  %194 = vmatpush1.msra.mxu0 %v58
  %195 = vmatprep.subr.mxu0 %v63
  %196 = vmatpush1.msra.mxu0 %v62
  %197 = vmatprep.subr.mxu0 %v67
  %198 = vmatpush1.msra.mxu0 %v66
  %199 = vmatprep.subr.mxu0 %v71
  %200 = vmatpush1.msra.mxu0 %v70
  %201 = vmatprep.subr.mxu0 0.0
  %202 = vmatpush1.msra.mxu0 0.0
  %203 = vmatprep.subr.mxu0 0.0
  %204 = vmatpush1.msra.mxu0 0.0
  %205 = vmatprep.subr.mxu0 0.0
  %206 = vmatpush1.msra.mxu0 0.0
  %207 = vmatprep.subr.mxu0 0.0
  %208 = vmatpush1.msra.mxu0 0.0
  %209 = vmatprep.subr.mxu0 0.0
  %210 = vmatpush1.msra.mxu0 0.0
  %211 = vmatprep.subr.mxu0 0.0
  %212 = vmatpush1.msra.mxu0 0.0
  %213 = vmatprep.subr.mxu0 0.0
  %214 = vmatpush1.msra.mxu0 0.0
  %215 = vmatprep.subr.mxu0 0.0
  %216 = vmatpush1.msra.mxu0 0.0
  %217 = vmatprep.subr.mxu0 0.0
  %218 = vmatpush1.msra.mxu0 0.0
  %219 = vmatprep.subr.mxu0 0.0
  %220 = vmatpush1.msra.mxu0 0.0
  %221 = vmatprep.subr.mxu0 0.0
  %222 = vmatpush1.msra.mxu0 0.0
  %223 = vmatprep.subr.mxu0 0.0
  %224 = vmatpush1.msra.mxu0 0.0
  %225 = vmatprep.subr.mxu0 0.0
  %226 = vmatpush1.msra.mxu0 0.0
  %227 = vmatprep.subr.mxu0 0.0
  %228 = vmatpush1.msra.mxu0 0.0
  %229 = vmatprep.subr.mxu0 0.0
  %230 = vmatpush1.msra.mxu0 0.0
  %231 = vmatprep.subr.mxu0 0.0
  %232 = vmatpush1.msra.mxu0 0.0
  %233 = vmatprep.subr.mxu0 0.0
  %234 = vmatpush1.msra.mxu0 0.0
  %235 = vmatprep.subr.mxu0 0.0
  %236 = vmatpush1.msra.mxu0 0.0
  %237 = vmatprep.subr.mxu0 0.0
  %238 = vmatpush1.msra.mxu0 0.0
  %239 = vmatprep.subr.mxu0 0.0
  %240 = vmatpush1.msra.mxu0 0.0
  %241 = vmatprep.subr.mxu0 0.0
  %242 = vmatpush1.msra.mxu0 0.0
  %243 = vmatprep.subr.mxu0 0.0
  %244 = vmatpush1.msra.mxu0 0.0
  %245 = vmatprep.subr.mxu0 0.0
  %246 = vmatpush1.msra.mxu0 0.0
  %247 = vmatprep.subr.mxu0 0.0
  %248 = vmatpush1.msra.mxu0 0.0
  %249 = vmatprep.subr.mxu0 0.0
  %250 = vmatpush1.msra.mxu0 0.0
  %251 = vmatprep.subr.mxu0 0.0
  %252 = vmatpush1.msra.mxu0 0.0
  %253 = vmatprep.subr.mxu0 0.0
  %254 = vmatpush1.msra.mxu0 0.0
  %255 = vmatprep.subr.mxu0 0.0
  %256 = vmatpush1.msra.mxu0 0.0
  %257 = vmatprep.mubr.f32.mxu0 0.0
  %258 = vmatmul.mubr.f32.gmra.mrb[0].mxu0 %v98
  %v259 = vpop.f32.mrb[0].mxu0
  %v260 = vadd.f32 %v79, %v259
  %v261 = vpop.f32.mrb[0].mxu0
  %v262 = vadd.f32 %v83, %v261
  %263 = vmatprep.mubr.f32.mxu0 0.0
  %264 = vmatmul.mubr.f32.gmra.mrb[0].mxu0 %v101
  %v265 = vpop.f32.mrb[0].mxu0
  %v266 = vadd.f32 %v79, %v265
  %v267 = vpop.f32.mrb[0].mxu0
  %v268 = vadd.f32 %v83, %v267
  %269 = vmatprep.mubr.f32.mxu0 0.0
  %270 = vmatmul.mubr.f32.gmra.mrb[0].mxu0 %v104
  %v271 = vpop.f32.mrb[0].mxu0
  %v272 = vadd.f32 %v79, %v271
  %v273 = vpop.f32.mrb[0].mxu0
  %v274 = vadd.f32 %v83, %v273
  %275 = vmatprep.mubr.f32.mxu0 0.0
  %276 = vmatmul.mubr.f32.gmra.mrb[0].mxu0 %v107
  %v277 = vpop.f32.mrb[0].mxu0
  %v278 = vadd.f32 %v79, %v277
  %v279 = vpop.f32.mrb[0].mxu0
  %v280 = vadd.f32 %v83, %v279
  %281 = vmatprep.mubr.f32.mxu0 0.0
  %282 = vmatmul.mubr.f32.gmra.mrb[0].mxu0 %v110
  %v283 = vpop.f32.mrb[0].mxu0
  %v284 = vadd.f32 %v79, %v283
  %v285 = vpop.f32.mrb[0].mxu0
  %v286 = vadd.f32 %v83, %v285
  %287 = vmatprep.mubr.f32.mxu0 0.0
  %288 = vmatmul.mubr.f32.gmra.mrb[0].mxu0 %v113
  %v289 = vpop.f32.mrb[0].mxu0
  %v290 = vadd.f32 %v79, %v289
  %v291 = vpop.f32.mrb[0].mxu0
  %v292 = vadd.f32 %v83, %v291
  %293 = vmatprep.mubr.f32.mxu0 0.0
  %294 = vmatmul.mubr.f32.gmra.mrb[0].mxu0 %v116
  %v295 = vpop.f32.mrb[0].mxu0
  %v296 = vadd.f32 %v79, %v295
  %v297 = vpop.f32.mrb[0].mxu0
  %v298 = vadd.f32 %v83, %v297
  %299 = vmatprep.mubr.f32.mxu0 0.0
  %300 = vmatmul.mubr.f32.gmra.mrb[0].mxu0 %v119
  %v301 = vpop.f32.mrb[0].mxu0
  %v302 = vadd.f32 %v79, %v301
  %v303 = vpop.f32.mrb[0].mxu0
  %v304 = vadd.f32 %v83, %v303
  %305 = vmatprep.mubr.f32.mxu0 0.0
  %306 = vmatmul.mubr.f32.gmra.mrb[0].mxu0 %v122
  %v307 = vpop.f32.mrb[0].mxu0
  %v308 = vadd.f32 %v79, %v307
  %v309 = vpop.f32.mrb[0].mxu0
  %v310 = vadd.f32 %v83, %v309
  %311 = vmatprep.mubr.f32.mxu0 0.0
  %312 = vmatmul.mubr.f32.gmra.mrb[0].mxu0 %v125
  %v313 = vpop.f32.mrb[0].mxu0
  %v314 = vadd.f32 %v79, %v313
  %v315 = vpop.f32.mrb[0].mxu0
  %v316 = vadd.f32 %v83, %v315
  %317 = vmatprep.mubr.f32.mxu0 0.0
  %318 = vmatmul.mubr.f32.gmra.mrb[0].mxu0 %v128
  %v319 = vpop.f32.mrb[0].mxu0
  %v320 = vadd.f32 %v79, %v319
  %v321 = vpop.f32.mrb[0].mxu0
  %v322 = vadd.f32 %v83, %v321
  %323 = vmatprep.mubr.f32.mxu0 0.0
  %324 = vmatmul.mubr.f32.gmra.mrb[0].mxu0 %v131
  %v325 = vpop.f32.mrb[0].mxu0
  %v326 = vadd.f32 %v79, %v325
  %v327 = vpop.f32.mrb[0].mxu0
  %v328 = vadd.f32 %v83, %v327
  %329 = vmatprep.mubr.f32.mxu0 0.0
  %330 = vmatmul.mubr.f32.gmra.mrb[0].mxu0 %v134
  %v331 = vpop.f32.mrb[0].mxu0
  %v332 = vadd.f32 %v79, %v331
  %v333 = vpop.f32.mrb[0].mxu0
  %v334 = vadd.f32 %v83, %v333
  %335 = vmatprep.mubr.f32.mxu0 0.0
  %336 = vmatmul.mubr.f32.gmra.mrb[0].mxu0 %v137
  %v337 = vpop.f32.mrb[0].mxu0
  %v338 = vadd.f32 %v79, %v337
  %v339 = vpop.f32.mrb[0].mxu0
  %v340 = vadd.f32 %v83, %v339
  %341 = vmatprep.mubr.f32.mxu0 0.0
  %342 = vmatmul.mubr.f32.gmra.mrb[0].mxu0 %v140
  %v343 = vpop.f32.mrb[0].mxu0
  %v344 = vadd.f32 %v79, %v343
  %v345 = vpop.f32.mrb[0].mxu0
  %v346 = vadd.f32 %v83, %v345
  %347 = vmatprep.mubr.f32.mxu0 0.0
  %348 = vmatmul.mubr.f32.gmra.mrb[0].mxu0 %v143
  %v349 = vpop.f32.mrb[0].mxu0
  %v350 = vadd.f32 %v79, %v349
  %v351 = vpop.f32.mrb[0].mxu0
  %v352 = vadd.f32 %v83, %v351
  %353 = vmatprep.mubr.f32.mxu0 0.0
  %354 = vmatmul.mubr.f32.gmra.mrb[0].mxu0 %v146
  %v355 = vpop.f32.mrb[0].mxu0
  %v356 = vadd.f32 %v79, %v355
  %v357 = vpop.f32.mrb[0].mxu0
  %v358 = vadd.f32 %v83, %v357
  %359 = vmatprep.mubr.f32.mxu0 0.0
  %360 = vmatmul.mubr.f32.gmra.mrb[0].mxu0 %v149
  %v361 = vpop.f32.mrb[0].mxu0
  %v362 = vadd.f32 %v79, %v361
  %v363 = vpop.f32.mrb[0].mxu0
  %v364 = vadd.f32 %v83, %v363
  %365 = vmatprep.mubr.f32.mxu0 0.0
  %366 = vmatmul.mubr.f32.gmra.mrb[0].mxu0 %v152
  %v367 = vpop.f32.mrb[0].mxu0
  %v368 = vadd.f32 %v79, %v367
  %v369 = vpop.f32.mrb[0].mxu0
  %v370 = vadd.f32 %v83, %v369
  %371 = vmatprep.mubr.f32.mxu0 0.0
  %372 = vmatmul.mubr.f32.gmra.mrb[0].mxu0 %v155
  %v373 = vpop.f32.mrb[0].mxu0
  %v374 = vadd.f32 %v79, %v373
  %v375 = vpop.f32.mrb[0].mxu0
  %v376 = vadd.f32 %v83, %v375
  %377 = vmatprep.mubr.f32.mxu0 0.0
  %378 = vmatmul.mubr.f32.gmra.mrb[0].mxu0 %v158
  %v379 = vpop.f32.mrb[0].mxu0
  %v380 = vadd.f32 %v79, %v379
  %v381 = vpop.f32.mrb[0].mxu0
  %v382 = vadd.f32 %v83, %v381
  %383 = vmatprep.mubr.f32.mxu0 0.0
  %384 = vmatmul.mubr.f32.gmra.mrb[0].mxu0 %v161
  %v385 = vpop.f32.mrb[0].mxu0
  %v386 = vadd.f32 %v79, %v385
  %v387 = vpop.f32.mrb[0].mxu0
  %v388 = vadd.f32 %v83, %v387
  %389 = vmatprep.mubr.f32.mxu0 0.0
  %390 = vmatmul.mubr.f32.gmra.mrb[0].mxu0 %v164
  %v391 = vpop.f32.mrb[0].mxu0
  %v392 = vadd.f32 %v79, %v391
  %v393 = vpop.f32.mrb[0].mxu0
  %v394 = vadd.f32 %v83, %v393
  %395 = vmatprep.mubr.f32.mxu0 0.0
  %396 = vmatmul.mubr.f32.gmra.mrb[0].mxu0 %v167
  %v397 = vpop.f32.mrb[0].mxu0
  %v398 = vadd.f32 %v79, %v397
  %v399 = vpop.f32.mrb[0].mxu0
  %v400 = vadd.f32 %v83, %v399
  %401 = vmatprep.mubr.f32.mxu0 0.0
  %402 = vmatmul.mubr.f32.gmra.mrb[0].mxu0 %v170
  %v403 = vpop.f32.mrb[0].mxu0
  %v404 = vadd.f32 %v79, %v403
  %v405 = vpop.f32.mrb[0].mxu0
  %v406 = vadd.f32 %v83, %v405
  %407 = vmatprep.mubr.f32.mxu0 0.0
  %408 = vmatmul.mubr.f32.gmra.mrb[0].mxu0 %v173
  %v409 = vpop.f32.mrb[0].mxu0
  %v410 = vadd.f32 %v79, %v409
  %v411 = vpop.f32.mrb[0].mxu0
  %v412 = vadd.f32 %v83, %v411
  %413 = vmatprep.mubr.f32.mxu0 0.0
  %414 = vmatmul.mubr.f32.gmra.mrb[0].mxu0 %v176
  %v415 = vpop.f32.mrb[0].mxu0
  %v416 = vadd.f32 %v79, %v415
  %v417 = vpop.f32.mrb[0].mxu0
  %v418 = vadd.f32 %v83, %v417
  %419 = vmatprep.mubr.f32.mxu0 0.0
  %420 = vmatmul.mubr.f32.gmra.mrb[0].mxu0 %v179
  %v421 = vpop.f32.mrb[0].mxu0
  %v422 = vadd.f32 %v79, %v421
  %v423 = vpop.f32.mrb[0].mxu0
  %v424 = vadd.f32 %v83, %v423
  %425 = vmatprep.mubr.f32.mxu0 0.0
  %426 = vmatmul.mubr.f32.gmra.mrb[0].mxu0 %v182
  %v427 = vpop.f32.mrb[0].mxu0
  %v428 = vadd.f32 %v79, %v427
  %v429 = vpop.f32.mrb[0].mxu0
  %v430 = vadd.f32 %v83, %v429
  %431 = vmatprep.mubr.f32.mxu0 0.0
  %432 = vmatmul.mubr.f32.gmra.mrb[0].mxu0 %v185
  %v433 = vpop.f32.mrb[0].mxu0
  %v434 = vadd.f32 %v79, %v433
  %v435 = vpop.f32.mrb[0].mxu0
  %v436 = vadd.f32 %v83, %v435
  %437 = vmatprep.mubr.f32.mxu0 0.0
  %438 = vmatmul.mubr.f32.gmra.mrb[0].mxu0 %v188
  %v439 = vpop.f32.mrb[0].mxu0
  %v440 = vadd.f32 %v79, %v439
  %v441 = vpop.f32.mrb[0].mxu0
  %v442 = vadd.f32 %v83, %v441
  %443 = vmatprep.mubr.f32.mxu0 0.0
  %444 = vmatmul.mubr.f32.gmra.mrb[0].mxu0 %v191
  %v445 = vpop.f32.mrb[0].mxu0
  %v446 = vadd.f32 %v79, %v445
  %v447 = vpop.f32.mrb[0].mxu0
  %v448 = vadd.f32 %v83, %v447
  %449 = vdwg.mxu0
  %450 = vmatprep.subr.mxu0 %v61
  %451 = vmatpush1.msra.mxu0 %v60
  %452 = vmatprep.subr.mxu0 %v65
  %453 = vmatpush1.msra.mxu0 %v64
  %454 = vmatprep.subr.mxu0 %v69
  %455 = vmatpush1.msra.mxu0 %v68
  %456 = vmatprep.subr.mxu0 %v73
  %457 = vmatpush1.msra.mxu0 %v72
  %458 = vmatprep.subr.mxu0 0.0
  %459 = vmatpush1.msra.mxu0 0.0
  %460 = vmatprep.subr.mxu0 0.0
  %461 = vmatpush1.msra.mxu0 0.0
  %462 = vmatprep.subr.mxu0 0.0
  %463 = vmatpush1.msra.mxu0 0.0
  %464 = vmatprep.subr.mxu0 0.0
  %465 = vmatpush1.msra.mxu0 0.0
  %466 = vmatprep.subr.mxu0 0.0
  %467 = vmatpush1.msra.mxu0 0.0
  %468 = vmatprep.subr.mxu0 0.0
  %469 = vmatpush1.msra.mxu0 0.0
  %470 = vmatprep.subr.mxu0 0.0
  %471 = vmatpush1.msra.mxu0 0.0
  %472 = vmatprep.subr.mxu0 0.0
  %473 = vmatpush1.msra.mxu0 0.0
  %474 = vmatprep.subr.mxu0 0.0
  %475 = vmatpush1.msra.mxu0 0.0
  %476 = vmatprep.subr.mxu0 0.0
  %477 = vmatpush1.msra.mxu0 0.0
  %478 = vmatprep.subr.mxu0 0.0
  %479 = vmatpush1.msra.mxu0 0.0
  %480 = vmatprep.subr.mxu0 0.0
  %481 = vmatpush1.msra.mxu0 0.0
  %482 = vmatprep.subr.mxu0 0.0
  %483 = vmatpush1.msra.mxu0 0.0
  %484 = vmatprep.subr.mxu0 0.0
  %485 = vmatpush1.msra.mxu0 0.0
  %486 = vmatprep.subr.mxu0 0.0
  %487 = vmatpush1.msra.mxu0 0.0
  %488 = vmatprep.subr.mxu0 0.0
  %489 = vmatpush1.msra.mxu0 0.0
  %490 = vmatprep.subr.mxu0 0.0
  %491 = vmatpush1.msra.mxu0 0.0
  %492 = vmatprep.subr.mxu0 0.0
  %493 = vmatpush1.msra.mxu0 0.0
  %494 = vmatprep.subr.mxu0 0.0
  %495 = vmatpush1.msra.mxu0 0.0
  %496 = vmatprep.subr.mxu0 0.0
  %497 = vmatpush1.msra.mxu0 0.0
  %498 = vmatprep.subr.mxu0 0.0
  %499 = vmatpush1.msra.mxu0 0.0
  %500 = vmatprep.subr.mxu0 0.0
  %501 = vmatpush1.msra.mxu0 0.0
  %502 = vmatprep.subr.mxu0 0.0
  %503 = vmatpush1.msra.mxu0 0.0
  %504 = vmatprep.subr.mxu0 0.0
  %505 = vmatpush1.msra.mxu0 0.0
  %506 = vmatprep.subr.mxu0 0.0
  %507 = vmatpush1.msra.mxu0 0.0
  %508 = vmatprep.subr.mxu0 0.0
  %509 = vmatpush1.msra.mxu0 0.0
  %510 = vmatprep.subr.mxu0 0.0
  %511 = vmatpush1.msra.mxu0 0.0
  %512 = vmatprep.subr.mxu0 0.0
  %513 = vmatpush1.msra.mxu0 0.0
  %514 = vmatprep.mubr.f32.mxu0 0.0
  %515 = vmatmul.mubr.f32.gmra.mrb[0].mxu0 %v98
  %v516 = vpop.f32.mrb[0].mxu0
  %v517 = vadd.f32 %v87, %v516
  %v518 = vpop.f32.mrb[0].mxu0
  %v519 = vadd.f32 %v91, %v518
  %520 = vmatprep.mubr.f32.mxu0 0.0
  %521 = vmatmul.mubr.f32.gmra.mrb[0].mxu0 %v101
  %v522 = vpop.f32.mrb[0].mxu0
  %v523 = vadd.f32 %v87, %v522
  %v524 = vpop.f32.mrb[0].mxu0
  %v525 = vadd.f32 %v91, %v524
  %526 = vmatprep.mubr.f32.mxu0 0.0
  %527 = vmatmul.mubr.f32.gmra.mrb[0].mxu0 %v104
  %v528 = vpop.f32.mrb[0].mxu0
  %v529 = vadd.f32 %v87, %v528
  %v530 = vpop.f32.mrb[0].mxu0
  %v531 = vadd.f32 %v91, %v530
  %532 = vmatprep.mubr.f32.mxu0 0.0
  %533 = vmatmul.mubr.f32.gmra.mrb[0].mxu0 %v107
  %v534 = vpop.f32.mrb[0].mxu0
  %v535 = vadd.f32 %v87, %v534
  %v536 = vpop.f32.mrb[0].mxu0
  %v537 = vadd.f32 %v91, %v536
  %538 = vmatprep.mubr.f32.mxu0 0.0
  %539 = vmatmul.mubr.f32.gmra.mrb[0].mxu0 %v110
  %v540 = vpop.f32.mrb[0].mxu0
  %v541 = vadd.f32 %v87, %v540
  %v542 = vpop.f32.mrb[0].mxu0
  %v543 = vadd.f32 %v91, %v542
  %544 = vmatprep.mubr.f32.mxu0 0.0
  %545 = vmatmul.mubr.f32.gmra.mrb[0].mxu0 %v113
  %v546 = vpop.f32.mrb[0].mxu0
  %v547 = vadd.f32 %v87, %v546
  %v548 = vpop.f32.mrb[0].mxu0
  %v549 = vadd.f32 %v91, %v548
  %550 = vmatprep.mubr.f32.mxu0 0.0
  %551 = vmatmul.mubr.f32.gmra.mrb[0].mxu0 %v116
  %v552 = vpop.f32.mrb[0].mxu0
  %v553 = vadd.f32 %v87, %v552
  %v554 = vpop.f32.mrb[0].mxu0
  %v555 = vadd.f32 %v91, %v554
  %556 = vmatprep.mubr.f32.mxu0 0.0
  %557 = vmatmul.mubr.f32.gmra.mrb[0].mxu0 %v119
  %v558 = vpop.f32.mrb[0].mxu0
  %v559 = vadd.f32 %v87, %v558
  %v560 = vpop.f32.mrb[0].mxu0
  %v561 = vadd.f32 %v91, %v560
  %562 = vmatprep.mubr.f32.mxu0 0.0
  %563 = vmatmul.mubr.f32.gmra.mrb[0].mxu0 %v122
  %v564 = vpop.f32.mrb[0].mxu0
  %v565 = vadd.f32 %v87, %v564
  %v566 = vpop.f32.mrb[0].mxu0
  %v567 = vadd.f32 %v91, %v566
  %568 = vmatprep.mubr.f32.mxu0 0.0
  %569 = vmatmul.mubr.f32.gmra.mrb[0].mxu0 %v125
  %v570 = vpop.f32.mrb[0].mxu0
  %v571 = vadd.f32 %v87, %v570
  %v572 = vpop.f32.mrb[0].mxu0
  %v573 = vadd.f32 %v91, %v572
  %574 = vmatprep.mubr.f32.mxu0 0.0
  %575 = vmatmul.mubr.f32.gmra.mrb[0].mxu0 %v128
  %v576 = vpop.f32.mrb[0].mxu0
  %v577 = vadd.f32 %v87, %v576
  %v578 = vpop.f32.mrb[0].mxu0
  %v579 = vadd.f32 %v91, %v578
  %580 = vmatprep.mubr.f32.mxu0 0.0
  %581 = vmatmul.mubr.f32.gmra.mrb[0].mxu0 %v131
  %v582 = vpop.f32.mrb[0].mxu0
  %v583 = vadd.f32 %v87, %v582
  %v584 = vpop.f32.mrb[0].mxu0
  %v585 = vadd.f32 %v91, %v584
  %586 = vmatprep.mubr.f32.mxu0 0.0
  %587 = vmatmul.mubr.f32.gmra.mrb[0].mxu0 %v134
  %v588 = vpop.f32.mrb[0].mxu0
  %v589 = vadd.f32 %v87, %v588
  %v590 = vpop.f32.mrb[0].mxu0
  %v591 = vadd.f32 %v91, %v590
  %592 = vmatprep.mubr.f32.mxu0 0.0
  %593 = vmatmul.mubr.f32.gmra.mrb[0].mxu0 %v137
  %v594 = vpop.f32.mrb[0].mxu0
  %v595 = vadd.f32 %v87, %v594
  %v596 = vpop.f32.mrb[0].mxu0
  %v597 = vadd.f32 %v91, %v596
  %598 = vmatprep.mubr.f32.mxu0 0.0
  %599 = vmatmul.mubr.f32.gmra.mrb[0].mxu0 %v140
  %v600 = vpop.f32.mrb[0].mxu0
  %v601 = vadd.f32 %v87, %v600
  %v602 = vpop.f32.mrb[0].mxu0
  %v603 = vadd.f32 %v91, %v602
  %604 = vmatprep.mubr.f32.mxu0 0.0
  %605 = vmatmul.mubr.f32.gmra.mrb[0].mxu0 %v143
  %v606 = vpop.f32.mrb[0].mxu0
  %v607 = vadd.f32 %v87, %v606
  %v608 = vpop.f32.mrb[0].mxu0
  %v609 = vadd.f32 %v91, %v608
  %610 = vmatprep.mubr.f32.mxu0 0.0
  %611 = vmatmul.mubr.f32.gmra.mrb[0].mxu0 %v146
  %v612 = vpop.f32.mrb[0].mxu0
  %v613 = vadd.f32 %v87, %v612
  %v614 = vpop.f32.mrb[0].mxu0
  %v615 = vadd.f32 %v91, %v614
  %616 = vmatprep.mubr.f32.mxu0 0.0
  %617 = vmatmul.mubr.f32.gmra.mrb[0].mxu0 %v149
  %v618 = vpop.f32.mrb[0].mxu0
  %v619 = vadd.f32 %v87, %v618
  %v620 = vpop.f32.mrb[0].mxu0
  %v621 = vadd.f32 %v91, %v620
  %622 = vmatprep.mubr.f32.mxu0 0.0
  %623 = vmatmul.mubr.f32.gmra.mrb[0].mxu0 %v152
  %v624 = vpop.f32.mrb[0].mxu0
  %v625 = vadd.f32 %v87, %v624
  %v626 = vpop.f32.mrb[0].mxu0
  %v627 = vadd.f32 %v91, %v626
  %628 = vmatprep.mubr.f32.mxu0 0.0
  %629 = vmatmul.mubr.f32.gmra.mrb[0].mxu0 %v155
  %v630 = vpop.f32.mrb[0].mxu0
  %v631 = vadd.f32 %v87, %v630
  %v632 = vpop.f32.mrb[0].mxu0
  %v633 = vadd.f32 %v91, %v632
  %634 = vmatprep.mubr.f32.mxu0 0.0
  %635 = vmatmul.mubr.f32.gmra.mrb[0].mxu0 %v158
  %v636 = vpop.f32.mrb[0].mxu0
  %v637 = vadd.f32 %v87, %v636
  %v638 = vpop.f32.mrb[0].mxu0
  %v639 = vadd.f32 %v91, %v638
  %640 = vmatprep.mubr.f32.mxu0 0.0
  %641 = vmatmul.mubr.f32.gmra.mrb[0].mxu0 %v161
  %v642 = vpop.f32.mrb[0].mxu0
  %v643 = vadd.f32 %v87, %v642
  %v644 = vpop.f32.mrb[0].mxu0
  %v645 = vadd.f32 %v91, %v644
  %646 = vmatprep.mubr.f32.mxu0 0.0
  %647 = vmatmul.mubr.f32.gmra.mrb[0].mxu0 %v164
  %v648 = vpop.f32.mrb[0].mxu0
  %v649 = vadd.f32 %v87, %v648
  %v650 = vpop.f32.mrb[0].mxu0
  %v651 = vadd.f32 %v91, %v650
  %652 = vmatprep.mubr.f32.mxu0 0.0
  %653 = vmatmul.mubr.f32.gmra.mrb[0].mxu0 %v167
  %v654 = vpop.f32.mrb[0].mxu0
  %v655 = vadd.f32 %v87, %v654
  %v656 = vpop.f32.mrb[0].mxu0
  %v657 = vadd.f32 %v91, %v656
  %658 = vmatprep.mubr.f32.mxu0 0.0
  %659 = vmatmul.mubr.f32.gmra.mrb[0].mxu0 %v170
  %v660 = vpop.f32.mrb[0].mxu0
  %v661 = vadd.f32 %v87, %v660
  %v662 = vpop.f32.mrb[0].mxu0
  %v663 = vadd.f32 %v91, %v662
  %664 = vmatprep.mubr.f32.mxu0 0.0
  %665 = vmatmul.mubr.f32.gmra.mrb[0].mxu0 %v173
  %v666 = vpop.f32.mrb[0].mxu0
  %v667 = vadd.f32 %v87, %v666
  %v668 = vpop.f32.mrb[0].mxu0
  %v669 = vadd.f32 %v91, %v668
  %670 = vmatprep.mubr.f32.mxu0 0.0
  %671 = vmatmul.mubr.f32.gmra.mrb[0].mxu0 %v176
  %v672 = vpop.f32.mrb[0].mxu0
  %v673 = vadd.f32 %v87, %v672
  %v674 = vpop.f32.mrb[0].mxu0
  %v675 = vadd.f32 %v91, %v674
  %676 = vmatprep.mubr.f32.mxu0 0.0
  %677 = vmatmul.mubr.f32.gmra.mrb[0].mxu0 %v179
  %v678 = vpop.f32.mrb[0].mxu0
  %v679 = vadd.f32 %v87, %v678
  %v680 = vpop.f32.mrb[0].mxu0
  %v681 = vadd.f32 %v91, %v680
  %682 = vmatprep.mubr.f32.mxu0 0.0
  %683 = vmatmul.mubr.f32.gmra.mrb[0].mxu0 %v182
  %v684 = vpop.f32.mrb[0].mxu0
  %v685 = vadd.f32 %v87, %v684
  %v686 = vpop.f32.mrb[0].mxu0
  %v687 = vadd.f32 %v91, %v686
  %688 = vmatprep.mubr.f32.mxu0 0.0
  %689 = vmatmul.mubr.f32.gmra.mrb[0].mxu0 %v185
  %v690 = vpop.f32.mrb[0].mxu0
  %v691 = vadd.f32 %v87, %v690
  %v692 = vpop.f32.mrb[0].mxu0
  %v693 = vadd.f32 %v91, %v692
  %694 = vmatprep.mubr.f32.mxu0 0.0
  %695 = vmatmul.mubr.f32.gmra.mrb[0].mxu0 %v188
  %v696 = vpop.f32.mrb[0].mxu0
  %v697 = vadd.f32 %v87, %v696
  %v698 = vpop.f32.mrb[0].mxu0
  %v699 = vadd.f32 %v91, %v698
  %700 = vmatprep.mubr.f32.mxu0 0.0
  %701 = vmatmul.mubr.f32.gmra.mrb[0].mxu0 %v191
  %v702 = vpop.f32.mrb[0].mxu0
  %v703 = vadd.f32 %v87, %v702
  %v704 = vpop.f32.mrb[0].mxu0
  %v705 = vadd.f32 %v91, %v704
  %706 = vdwg.mxu0
  %v707 = vmax.f32 %v260, 0.0
  %v708 = vmax.f32 %v262, 0.0
  %v709 = vmax.f32 %v517, 0.0
  %v710 = vmax.f32 %v519, 0.0
  %v711 = vmax.f32 %v266, 0.0
  %v712 = vmax.f32 %v268, 0.0
  %v713 = vmax.f32 %v523, 0.0
  %v714 = vmax.f32 %v525, 0.0
  %v715 = vmax.f32 %v272, 0.0
  %v716 = vmax.f32 %v274, 0.0
  %v717 = vmax.f32 %v529, 0.0
  %v718 = vmax.f32 %v531, 0.0
  %v719 = vmax.f32 %v278, 0.0
  %v720 = vmax.f32 %v280, 0.0
  %v721 = vmax.f32 %v535, 0.0
  %v722 = vmax.f32 %v537, 0.0
  %v723 = vmax.f32 %v284, 0.0
  %v724 = vmax.f32 %v286, 0.0
  %v725 = vmax.f32 %v541, 0.0
  %v726 = vmax.f32 %v543, 0.0
  %v727 = vmax.f32 %v290, 0.0
  %v728 = vmax.f32 %v292, 0.0
  %v729 = vmax.f32 %v547, 0.0
  %v730 = vmax.f32 %v549, 0.0
  %v731 = vmax.f32 %v296, 0.0
  %v732 = vmax.f32 %v298, 0.0
  %v733 = vmax.f32 %v553, 0.0
  %v734 = vmax.f32 %v555, 0.0
  %v735 = vmax.f32 %v302, 0.0
  %v736 = vmax.f32 %v304, 0.0
  %v737 = vmax.f32 %v559, 0.0
  %v738 = vmax.f32 %v561, 0.0
  %v739 = vmax.f32 %v308, 0.0
  %v740 = vmax.f32 %v310, 0.0
  %v741 = vmax.f32 %v565, 0.0
  %v742 = vmax.f32 %v567, 0.0
  %v743 = vmax.f32 %v314, 0.0
  %v744 = vmax.f32 %v316, 0.0
  %v745 = vmax.f32 %v571, 0.0
  %v746 = vmax.f32 %v573, 0.0
  %v747 = vmax.f32 %v320, 0.0
  %v748 = vmax.f32 %v322, 0.0
  %v749 = vmax.f32 %v577, 0.0
  %v750 = vmax.f32 %v579, 0.0
  %v751 = vmax.f32 %v326, 0.0
  %v752 = vmax.f32 %v328, 0.0
  %v753 = vmax.f32 %v583, 0.0
  %v754 = vmax.f32 %v585, 0.0
  %v755 = vmax.f32 %v332, 0.0
  %v756 = vmax.f32 %v334, 0.0
  %v757 = vmax.f32 %v589, 0.0
  %v758 = vmax.f32 %v591, 0.0
  %v759 = vmax.f32 %v338, 0.0
  %v760 = vmax.f32 %v340, 0.0
  %v761 = vmax.f32 %v595, 0.0
  %v762 = vmax.f32 %v597, 0.0
  %v763 = vmax.f32 %v344, 0.0
  %v764 = vmax.f32 %v346, 0.0
  %v765 = vmax.f32 %v601, 0.0
  %v766 = vmax.f32 %v603, 0.0
  %v767 = vmax.f32 %v350, 0.0
  %v768 = vmax.f32 %v352, 0.0
  %v769 = vmax.f32 %v607, 0.0
  %v770 = vmax.f32 %v609, 0.0
  %v771 = vmax.f32 %v356, 0.0
  %v772 = vmax.f32 %v358, 0.0
  %v773 = vmax.f32 %v613, 0.0
  %v774 = vmax.f32 %v615, 0.0
  %v775 = vmax.f32 %v362, 0.0
  %v776 = vmax.f32 %v364, 0.0
  %v777 = vmax.f32 %v619, 0.0
  %v778 = vmax.f32 %v621, 0.0
  %v779 = vmax.f32 %v368, 0.0
  %v780 = vmax.f32 %v370, 0.0
  %v781 = vmax.f32 %v625, 0.0
  %v782 = vmax.f32 %v627, 0.0
  %v783 = vmax.f32 %v374, 0.0
  %v784 = vmax.f32 %v376, 0.0
  %v785 = vmax.f32 %v631, 0.0
  %v786 = vmax.f32 %v633, 0.0
  %v787 = vmax.f32 %v380, 0.0
  %v788 = vmax.f32 %v382, 0.0
  %v789 = vmax.f32 %v637, 0.0
  %v790 = vmax.f32 %v639, 0.0
  %v791 = vmax.f32 %v386, 0.0
  %v792 = vmax.f32 %v388, 0.0
  %v793 = vmax.f32 %v643, 0.0
  %v794 = vmax.f32 %v645, 0.0
  %v795 = vmax.f32 %v392, 0.0
  %v796 = vmax.f32 %v394, 0.0
  %v797 = vmax.f32 %v649, 0.0
  %v798 = vmax.f32 %v651, 0.0
  %v799 = vmax.f32 %v398, 0.0
  %v800 = vmax.f32 %v400, 0.0
  %v801 = vmax.f32 %v655, 0.0
  %v802 = vmax.f32 %v657, 0.0
  %v803 = vmax.f32 %v404, 0.0
  %v804 = vmax.f32 %v406, 0.0
  %v805 = vmax.f32 %v661, 0.0
  %v806 = vmax.f32 %v663, 0.0
  %v807 = vmax.f32 %v410, 0.0
  %v808 = vmax.f32 %v412, 0.0
  %v809 = vmax.f32 %v667, 0.0
  %v810 = vmax.f32 %v669, 0.0
  %v811 = vmax.f32 %v416, 0.0
  %v812 = vmax.f32 %v418, 0.0
  %v813 = vmax.f32 %v673, 0.0
  %v814 = vmax.f32 %v675, 0.0
  %v815 = vmax.f32 %v422, 0.0
  %v816 = vmax.f32 %v424, 0.0
  %v817 = vmax.f32 %v679, 0.0
  %v818 = vmax.f32 %v681, 0.0
  %v819 = vmax.f32 %v428, 0.0
  %v820 = vmax.f32 %v430, 0.0
  %v821 = vmax.f32 %v685, 0.0
  %v822 = vmax.f32 %v687, 0.0
  %v823 = vmax.f32 %v434, 0.0
  %v824 = vmax.f32 %v436, 0.0
  %v825 = vmax.f32 %v691, 0.0
  %v826 = vmax.f32 %v693, 0.0
  %v827 = vmax.f32 %v440, 0.0
  %v828 = vmax.f32 %v442, 0.0
  %v829 = vmax.f32 %v697, 0.0
  %v830 = vmax.f32 %v699, 0.0
  %v831 = vmax.f32 %v446, 0.0
  %v832 = vmax.f32 %v448, 0.0
  %v833 = vmax.f32 %v703, 0.0
  %v834 = vmax.f32 %v705, 0.0
  %v835 = vld [vmem:[%s3] sm:$0xff]
  %v836 = vld [vmem:[%s3 + $0x8] sm:$0xff]
  %v837 = vld [vmem:[%s3 + $0x10] sm:$0xff]
  %v838 = vld [vmem:[%s3 + $0x18] sm:$0xff]
  %v839 = vld [vmem:[%s3 + $0x20] sm:$0xff]
  %v840 = vld [vmem:[%s3 + $0x28] sm:$0xff]
  %v841 = vld [vmem:[%s3 + $0x30] sm:$0xff]
  %v842 = vld [vmem:[%s3 + $0x38] sm:$0xff]
  %v843 = vld [vmem:[%s3 + $0x40] sm:$0xff]
  %v844 = vld [vmem:[%s3 + $0x48] sm:$0xff]
  %v845 = vld [vmem:[%s3 + $0x50] sm:$0xff]
  %v846 = vld [vmem:[%s3 + $0x58] sm:$0xff]
  %v847 = vld [vmem:[%s3 + $0x60] sm:$0xff]
  %v848 = vld [vmem:[%s3 + $0x68] sm:$0xff]
  %v849 = vld [vmem:[%s3 + $0x70] sm:$0xff]
  %v850 = vld [vmem:[%s3 + $0x78] sm:$0xff]
  %v851 = vld [vmem:[%s3 + $0x80] sm:$0xff]
  %v852 = vld [vmem:[%s3 + $0x88] sm:$0xff]
  %v853 = vld [vmem:[%s3 + $0x90] sm:$0xff]
  %v854 = vld [vmem:[%s3 + $0x98] sm:$0xff]
  %v855 = vld [vmem:[%s3 + $0xa0] sm:$0xff]
  %v856 = vld [vmem:[%s3 + $0xa8] sm:$0xff]
  %v857 = vld [vmem:[%s3 + $0xb0] sm:$0xff]
  %v858 = vld [vmem:[%s3 + $0xb8] sm:$0xff]
  %v859 = vld [vmem:[%s3 + $0xc0] sm:$0xff]
  %v860 = vld [vmem:[%s3 + $0xc8] sm:$0xff]
  %v861 = vld [vmem:[%s3 + $0xd0] sm:$0xff]
  %v862 = vld [vmem:[%s3 + $0xd8] sm:$0xff]
  %v863 = vld [vmem:[%s3 + $0xe0] sm:$0xff]
  %v864 = vld [vmem:[%s3 + $0xe8] sm:$0xff]
  %v865 = vld [vmem:[%s3 + $0xf0] sm:$0xff]
  %v866 = vld [vmem:[%s3 + $0xf8] sm:$0xff]
  %v867 = vld [vmem:[%s3 + $0x100] sm:$0xff]
  %v868 = vld [vmem:[%s3 + $0x108] sm:$0xff]
  %v869 = vld [vmem:[%s3 + $0x110] sm:$0xff]
  %v870 = vld [vmem:[%s3 + $0x118] sm:$0xff]
  %v871 = vld [vmem:[%s3 + $0x120] sm:$0xff]
  %v872 = vld [vmem:[%s3 + $0x128] sm:$0xff]
  %v873 = vld [vmem:[%s3 + $0x130] sm:$0xff]
  %v874 = vld [vmem:[%s3 + $0x138] sm:$0xff]
  %v875 = vld [vmem:[%s3 + $0x140] sm:$0xff]
  %v876 = vld [vmem:[%s3 + $0x148] sm:$0xff]
  %v877 = vld [vmem:[%s3 + $0x150] sm:$0xff]
  %v878 = vld [vmem:[%s3 + $0x158] sm:$0xff]
  %v879 = vld [vmem:[%s3 + $0x160] sm:$0xff]
  %v880 = vld [vmem:[%s3 + $0x168] sm:$0xff]
  %v881 = vld [vmem:[%s3 + $0x170] sm:$0xff]
  %v882 = vld [vmem:[%s3 + $0x178] sm:$0xff]
  %v883 = vld [vmem:[%s3 + $0x180] sm:$0xff]
  %v884 = vld [vmem:[%s3 + $0x188] sm:$0xff]
  %v885 = vld [vmem:[%s3 + $0x190] sm:$0xff]
  %v886 = vld [vmem:[%s3 + $0x198] sm:$0xff]
  %v887 = vld [vmem:[%s3 + $0x1a0] sm:$0xff]
  %v888 = vld [vmem:[%s3 + $0x1a8] sm:$0xff]
  %v889 = vld [vmem:[%s3 + $0x1b0] sm:$0xff]
  %v890 = vld [vmem:[%s3 + $0x1b8] sm:$0xff]
  %v891 = vld [vmem:[%s3 + $0x1c0] sm:$0xff]
  %v892 = vld [vmem:[%s3 + $0x1c8] sm:$0xff]
  %v893 = vld [vmem:[%s3 + $0x1d0] sm:$0xff]
  %v894 = vld [vmem:[%s3 + $0x1d8] sm:$0xff]
  %v895 = vld [vmem:[%s3 + $0x1e0] sm:$0xff]
  %v896 = vld [vmem:[%s3 + $0x1e8] sm:$0xff]
  %v897 = vld [vmem:[%s3 + $0x1f0] sm:$0xff]
  %v898 = vld [vmem:[%s3 + $0x1f8] sm:$0xff]
  %v899 = vld [vmem:[%s3 + $0x200] sm:$0xff]
  %v900 = vld [vmem:[%s3 + $0x208] sm:$0xff]
  %v901 = vld [vmem:[%s3 + $0x210] sm:$0xff]
  %v902 = vld [vmem:[%s3 + $0x218] sm:$0xff]
  %v903 = vld [vmem:[%s3 + $0x220] sm:$0xff]
  %v904 = vld [vmem:[%s3 + $0x228] sm:$0xff]
  %v905 = vld [vmem:[%s3 + $0x230] sm:$0xff]
  %v906 = vld [vmem:[%s3 + $0x238] sm:$0xff]
  %v907 = vld [vmem:[%s3 + $0x240] sm:$0xff]
  %v908 = vld [vmem:[%s3 + $0x248] sm:$0xff]
  %v909 = vld [vmem:[%s3 + $0x250] sm:$0xff]
  %v910 = vld [vmem:[%s3 + $0x258] sm:$0xff]
  %v911 = vld [vmem:[%s3 + $0x260] sm:$0xff]
  %v912 = vld [vmem:[%s3 + $0x268] sm:$0xff]
  %v913 = vld [vmem:[%s3 + $0x270] sm:$0xff]
  %v914 = vld [vmem:[%s3 + $0x278] sm:$0xff]
  %v915 = vld [vmem:[%s3 + $0x280] sm:$0xff]
  %v916 = vld [vmem:[%s3 + $0x288] sm:$0xff]
  %v917 = vld [vmem:[%s3 + $0x290] sm:$0xff]
  %v918 = vld [vmem:[%s3 + $0x298] sm:$0xff]
  %v919 = vld [vmem:[%s3 + $0x2a0] sm:$0xff]
  %v920 = vld [vmem:[%s3 + $0x2a8] sm:$0xff]
  %v921 = vld [vmem:[%s3 + $0x2b0] sm:$0xff]
  %v922 = vld [vmem:[%s3 + $0x2b8] sm:$0xff]
  %v923 = vld [vmem:[%s3 + $0x2c0] sm:$0xff]
  %v924 = vld [vmem:[%s3 + $0x2c8] sm:$0xff]
  %v925 = vld [vmem:[%s3 + $0x2d0] sm:$0xff]
  %v926 = vld [vmem:[%s3 + $0x2d8] sm:$0xff]
  %v927 = vld [vmem:[%s3 + $0x2e0] sm:$0xff]
  %v928 = vld [vmem:[%s3 + $0x2e8] sm:$0xff]
  %v929 = vld [vmem:[%s3 + $0x2f0] sm:$0xff]
  %v930 = vld [vmem:[%s3 + $0x2f8] sm:$0xff]
  %v931 = vld [vmem:[%s3 + $0x300] sm:$0xff]
  %v932 = vld [vmem:[%s3 + $0x308] sm:$0xff]
  %v933 = vld [vmem:[%s3 + $0x310] sm:$0xff]
  %v934 = vld [vmem:[%s3 + $0x318] sm:$0xff]
  %v935 = vld [vmem:[%s3 + $0x320] sm:$0xff]
  %v936 = vld [vmem:[%s3 + $0x328] sm:$0xff]
  %v937 = vld [vmem:[%s3 + $0x330] sm:$0xff]
  %v938 = vld [vmem:[%s3 + $0x338] sm:$0xff]
  %v939 = vld [vmem:[%s3 + $0x340] sm:$0xff]
  %v940 = vld [vmem:[%s3 + $0x348] sm:$0xff]
  %v941 = vld [vmem:[%s3 + $0x350] sm:$0xff]
  %v942 = vld [vmem:[%s3 + $0x358] sm:$0xff]
  %v943 = vld [vmem:[%s3 + $0x360] sm:$0xff]
  %v944 = vld [vmem:[%s3 + $0x368] sm:$0xff]
  %v945 = vld [vmem:[%s3 + $0x370] sm:$0xff]
  %v946 = vld [vmem:[%s3 + $0x378] sm:$0xff]
  %v947 = vld [vmem:[%s3 + $0x380] sm:$0xff]
  %v948 = vld [vmem:[%s3 + $0x388] sm:$0xff]
  %v949 = vld [vmem:[%s3 + $0x390] sm:$0xff]
  %v950 = vld [vmem:[%s3 + $0x398] sm:$0xff]
  %v951 = vld [vmem:[%s3 + $0x3a0] sm:$0xff]
  %v952 = vld [vmem:[%s3 + $0x3a8] sm:$0xff]
  %v953 = vld [vmem:[%s3 + $0x3b0] sm:$0xff]
  %v954 = vld [vmem:[%s3 + $0x3b8] sm:$0xff]
  %v955 = vld [vmem:[%s3 + $0x3c0] sm:$0xff]
  %v956 = vld [vmem:[%s3 + $0x3c8] sm:$0xff]
  %v957 = vld [vmem:[%s3 + $0x3d0] sm:$0xff]
  %v958 = vld [vmem:[%s3 + $0x3d8] sm:$0xff]
  %v959 = vld [vmem:[%s3 + $0x3e0] sm:$0xff]
  %v960 = vld [vmem:[%s3 + $0x3e8] sm:$0xff]
  %v961 = vld [vmem:[%s3 + $0x3f0] sm:$0xff]
  %v962 = vld [vmem:[%s3 + $0x3f8] sm:$0xff]
  %v963 = vld [vmem:[%s3 + $0x400] sm:$0xff]
  %v964 = vld [vmem:[%s3 + $0x408] sm:$0xff]
  %v965 = vld [vmem:[%s3 + $0x410] sm:$0xff]
  %v966 = vld [vmem:[%s3 + $0x418] sm:$0xff]
  %v967 = vld [vmem:[%s3 + $0x420] sm:$0xff]
  %v968 = vld [vmem:[%s3 + $0x428] sm:$0xff]
  %v969 = vld [vmem:[%s3 + $0x430] sm:$0xff]
  %v970 = vld [vmem:[%s3 + $0x438] sm:$0xff]
  %v971 = vld [vmem:[%s3 + $0x440] sm:$0xff]
  %v972 = vld [vmem:[%s3 + $0x448] sm:$0xff]
  %v973 = vld [vmem:[%s3 + $0x450] sm:$0xff]
  %v974 = vld [vmem:[%s3 + $0x458] sm:$0xff]
  %v975 = vld [vmem:[%s3 + $0x460] sm:$0xff]
  %v976 = vld [vmem:[%s3 + $0x468] sm:$0xff]
  %v977 = vld [vmem:[%s3 + $0x470] sm:$0xff]
  %v978 = vld [vmem:[%s3 + $0x478] sm:$0xff]
  %v979 = vld [vmem:[%s3 + $0x480] sm:$0xff]
  %v980 = vld [vmem:[%s3 + $0x488] sm:$0xff]
  %v981 = vld [vmem:[%s3 + $0x490] sm:$0xff]
  %v982 = vld [vmem:[%s3 + $0x498] sm:$0xff]
  %v983 = vld [vmem:[%s3 + $0x4a0] sm:$0xff]
  %v984 = vld [vmem:[%s3 + $0x4a8] sm:$0xff]
  %v985 = vld [vmem:[%s3 + $0x4b0] sm:$0xff]
  %v986 = vld [vmem:[%s3 + $0x4b8] sm:$0xff]
  %v987 = vld [vmem:[%s3 + $0x4c0] sm:$0xff]
  %v988 = vld [vmem:[%s3 + $0x4c8] sm:$0xff]
  %v989 = vld [vmem:[%s3 + $0x4d0] sm:$0xff]
  %v990 = vld [vmem:[%s3 + $0x4d8] sm:$0xff]
  %v991 = vld [vmem:[%s3 + $0x4e0] sm:$0xff]
  %v992 = vld [vmem:[%s3 + $0x4e8] sm:$0xff]
  %v993 = vld [vmem:[%s3 + $0x4f0] sm:$0xff]
  %v994 = vld [vmem:[%s3 + $0x4f8] sm:$0xff]
  %v995 = vld [vmem:[%s3 + $0x500] sm:$0xff]
  %v996 = vld [vmem:[%s3 + $0x508] sm:$0xff]
  %v997 = vld [vmem:[%s3 + $0x510] sm:$0xff]
  %v998 = vld [vmem:[%s3 + $0x518] sm:$0xff]
  %v999 = vld [vmem:[%s3 + $0x520] sm:$0xff]
  %v1000 = vld [vmem:[%s3 + $0x528] sm:$0xff]
  %v1001 = vld [vmem:[%s3 + $0x530] sm:$0xff]
  %v1002 = vld [vmem:[%s3 + $0x538] sm:$0xff]
  %v1003 = vld [vmem:[%s3 + $0x540] sm:$0xff]
  %v1004 = vld [vmem:[%s3 + $0x548] sm:$0xff]
  %v1005 = vld [vmem:[%s3 + $0x550] sm:$0xff]
  %v1006 = vld [vmem:[%s3 + $0x558] sm:$0xff]
  %v1007 = vld [vmem:[%s3 + $0x560] sm:$0xff]
  %v1008 = vld [vmem:[%s3 + $0x568] sm:$0xff]
  %v1009 = vld [vmem:[%s3 + $0x570] sm:$0xff]
  %v1010 = vld [vmem:[%s3 + $0x578] sm:$0xff]
  %v1011 = vld [vmem:[%s3 + $0x580] sm:$0xff]
  %v1012 = vld [vmem:[%s3 + $0x588] sm:$0xff]
  %v1013 = vld [vmem:[%s3 + $0x590] sm:$0xff]
  %v1014 = vld [vmem:[%s3 + $0x598] sm:$0xff]
  %v1015 = vld [vmem:[%s3 + $0x5a0] sm:$0xff]
  %v1016 = vld [vmem:[%s3 + $0x5a8] sm:$0xff]
  %v1017 = vld [vmem:[%s3 + $0x5b0] sm:$0xff]
  %v1018 = vld [vmem:[%s3 + $0x5b8] sm:$0xff]
  %v1019 = vld [vmem:[%s3 + $0x5c0] sm:$0xff]
  %v1020 = vld [vmem:[%s3 + $0x5c8] sm:$0xff]
  %v1021 = vld [vmem:[%s3 + $0x5d0] sm:$0xff]
  %v1022 = vld [vmem:[%s3 + $0x5d8] sm:$0xff]
  %v1023 = vld [vmem:[%s3 + $0x5e0] sm:$0xff]
  %v1024 = vld [vmem:[%s3 + $0x5e8] sm:$0xff]
  %v1025 = vld [vmem:[%s3 + $0x5f0] sm:$0xff]
  %v1026 = vld [vmem:[%s3 + $0x5f8] sm:$0xff]
  %v1027 = vld [vmem:[%s3 + $0x600] sm:$0xff]
  %v1028 = vld [vmem:[%s3 + $0x608] sm:$0xff]
  %v1029 = vld [vmem:[%s3 + $0x610] sm:$0xff]
  %v1030 = vld [vmem:[%s3 + $0x618] sm:$0xff]
  %v1031 = vld [vmem:[%s3 + $0x620] sm:$0xff]
  %v1032 = vld [vmem:[%s3 + $0x628] sm:$0xff]
  %v1033 = vld [vmem:[%s3 + $0x630] sm:$0xff]
  %v1034 = vld [vmem:[%s3 + $0x638] sm:$0xff]
  %v1035 = vld [vmem:[%s3 + $0x640] sm:$0xff]
  %v1036 = vld [vmem:[%s3 + $0x648] sm:$0xff]
  %v1037 = vld [vmem:[%s3 + $0x650] sm:$0xff]
  %v1038 = vld [vmem:[%s3 + $0x658] sm:$0xff]
  %v1039 = vld [vmem:[%s3 + $0x660] sm:$0xff]
  %v1040 = vld [vmem:[%s3 + $0x668] sm:$0xff]
  %v1041 = vld [vmem:[%s3 + $0x670] sm:$0xff]
  %v1042 = vld [vmem:[%s3 + $0x678] sm:$0xff]
  %v1043 = vld [vmem:[%s3 + $0x680] sm:$0xff]
  %v1044 = vld [vmem:[%s3 + $0x688] sm:$0xff]
  %v1045 = vld [vmem:[%s3 + $0x690] sm:$0xff]
  %v1046 = vld [vmem:[%s3 + $0x698] sm:$0xff]
  %v1047 = vld [vmem:[%s3 + $0x6a0] sm:$0xff]
  %v1048 = vld [vmem:[%s3 + $0x6a8] sm:$0xff]
  %v1049 = vld [vmem:[%s3 + $0x6b0] sm:$0xff]
  %v1050 = vld [vmem:[%s3 + $0x6b8] sm:$0xff]
  %v1051 = vld [vmem:[%s3 + $0x6c0] sm:$0xff]
  %v1052 = vld [vmem:[%s3 + $0x6c8] sm:$0xff]
  %v1053 = vld [vmem:[%s3 + $0x6d0] sm:$0xff]
  %v1054 = vld [vmem:[%s3 + $0x6d8] sm:$0xff]
  %v1055 = vld [vmem:[%s3 + $0x6e0] sm:$0xff]
  %v1056 = vld [vmem:[%s3 + $0x6e8] sm:$0xff]
  %v1057 = vld [vmem:[%s3 + $0x6f0] sm:$0xff]
  %v1058 = vld [vmem:[%s3 + $0x6f8] sm:$0xff]
  %v1059 = vld [vmem:[%s3 + $0x700] sm:$0xff]
  %v1060 = vld [vmem:[%s3 + $0x708] sm:$0xff]
  %v1061 = vld [vmem:[%s3 + $0x710] sm:$0xff]
  %v1062 = vld [vmem:[%s3 + $0x718] sm:$0xff]
  %v1063 = vld [vmem:[%s3 + $0x720] sm:$0xff]
  %v1064 = vld [vmem:[%s3 + $0x728] sm:$0xff]
  %v1065 = vld [vmem:[%s3 + $0x730] sm:$0xff]
  %v1066 = vld [vmem:[%s3 + $0x738] sm:$0xff]
  %v1067 = vld [vmem:[%s3 + $0x740] sm:$0xff]
  %v1068 = vld [vmem:[%s3 + $0x748] sm:$0xff]
  %v1069 = vld [vmem:[%s3 + $0x750] sm:$0xff]
  %v1070 = vld [vmem:[%s3 + $0x758] sm:$0xff]
  %v1071 = vld [vmem:[%s3 + $0x760] sm:$0xff]
  %v1072 = vld [vmem:[%s3 + $0x768] sm:$0xff]
  %v1073 = vld [vmem:[%s3 + $0x770] sm:$0xff]
  %v1074 = vld [vmem:[%s3 + $0x778] sm:$0xff]
  %v1075 = vld [vmem:[%s3 + $0x780] sm:$0xff]
  %v1076 = vld [vmem:[%s3 + $0x788] sm:$0xff]
  %v1077 = vld [vmem:[%s3 + $0x790] sm:$0xff]
  %v1078 = vld [vmem:[%s3 + $0x798] sm:$0xff]
  %v1079 = vld [vmem:[%s3 + $0x7a0] sm:$0xff]
  %v1080 = vld [vmem:[%s3 + $0x7a8] sm:$0xff]
  %v1081 = vld [vmem:[%s3 + $0x7b0] sm:$0xff]
  %v1082 = vld [vmem:[%s3 + $0x7b8] sm:$0xff]
  %v1083 = vld [vmem:[%s3 + $0x7c0] sm:$0xff]
  %v1084 = vld [vmem:[%s3 + $0x7c8] sm:$0xff]
  %v1085 = vld [vmem:[%s3 + $0x7d0] sm:$0xff]
  %v1086 = vld [vmem:[%s3 + $0x7d8] sm:$0xff]
  %v1087 = vld [vmem:[%s3 + $0x7e0] sm:$0xff]
  %v1088 = vld [vmem:[%s3 + $0x7e8] sm:$0xff]
  %v1089 = vld [vmem:[%s3 + $0x7f0] sm:$0xff]
  %v1090 = vld [vmem:[%s3 + $0x7f8] sm:$0xff]
  %v1091 = vld [vmem:[%s4] sm:$0xf]
  %v1093 = vlaneseq
  %v1094 = vshrl.u32 %v1093, 7
  %v1095 = vsub.s32 0, %v1094
  %v1096 = vrot.slane %v1091, %v1095
  %v1097 = vlaneseq
  %v1098 = vshrl.u32 %v1097, 7
  %v1099 = vsub.s32 1, %v1098
  %v1100 = vrot.slane %v1091, %v1099
  %v1101 = vlaneseq
  %v1102 = vshrl.u32 %v1101, 7
  %v1103 = vsub.s32 2, %v1102
  %v1104 = vrot.slane %v1091, %v1103
  %v1105 = vlaneseq
  %v1106 = vshrl.u32 %v1105, 7
  %v1107 = vsub.s32 3, %v1106
  %v1108 = vrot.slane %v1091, %v1107
  %1113 = vmatprep.subr.mxu0 %v836
  %1114 = vmatpush1.msra.mxu0 %v835
  %1115 = vmatprep.subr.mxu0 %v840
  %1116 = vmatpush1.msra.mxu0 %v839
  %1117 = vmatprep.subr.mxu0 %v844
  %1118 = vmatpush1.msra.mxu0 %v843
  %1119 = vmatprep.subr.mxu0 %v848
  %1120 = vmatpush1.msra.mxu0 %v847
  %1121 = vmatprep.subr.mxu0 %v852
  %1122 = vmatpush1.msra.mxu0 %v851
  %1123 = vmatprep.subr.mxu0 %v856
  %1124 = vmatpush1.msra.mxu0 %v855
  %1125 = vmatprep.subr.mxu0 %v860
  %1126 = vmatpush1.msra.mxu0 %v859
  %1127 = vmatprep.subr.mxu0 %v864
  %1128 = vmatpush1.msra.mxu0 %v863
  %1129 = vmatprep.subr.mxu0 %v868
  %1130 = vmatpush1.msra.mxu0 %v867
  %1131 = vmatprep.subr.mxu0 %v872
  %1132 = vmatpush1.msra.mxu0 %v871
  %1133 = vmatprep.subr.mxu0 %v876
  %1134 = vmatpush1.msra.mxu0 %v875
  %1135 = vmatprep.subr.mxu0 %v880
  %1136 = vmatpush1.msra.mxu0 %v879
  %1137 = vmatprep.subr.mxu0 %v884
  %1138 = vmatpush1.msra.mxu0 %v883
  %1139 = vmatprep.subr.mxu0 %v888
  %1140 = vmatpush1.msra.mxu0 %v887
  %1141 = vmatprep.subr.mxu0 %v892
  %1142 = vmatpush1.msra.mxu0 %v891
  %1143 = vmatprep.subr.mxu0 %v896
  %1144 = vmatpush1.msra.mxu0 %v895
  %1145 = vmatprep.subr.mxu0 %v900
  %1146 = vmatpush1.msra.mxu0 %v899
  %1147 = vmatprep.subr.mxu0 %v904
  %1148 = vmatpush1.msra.mxu0 %v903
  %1149 = vmatprep.subr.mxu0 %v908
  %1150 = vmatpush1.msra.mxu0 %v907
  %1151 = vmatprep.subr.mxu0 %v912
  %1152 = vmatpush1.msra.mxu0 %v911
  %1153 = vmatprep.subr.mxu0 %v916
  %1154 = vmatpush1.msra.mxu0 %v915
  %1155 = vmatprep.subr.mxu0 %v920
  %1156 = vmatpush1.msra.mxu0 %v919
  %1157 = vmatprep.subr.mxu0 %v924
  %1158 = vmatpush1.msra.mxu0 %v923
  %1159 = vmatprep.subr.mxu0 %v928
  %1160 = vmatpush1.msra.mxu0 %v927
  %1161 = vmatprep.subr.mxu0 %v932
  %1162 = vmatpush1.msra.mxu0 %v931
  %1163 = vmatprep.subr.mxu0 %v936
  %1164 = vmatpush1.msra.mxu0 %v935
  %1165 = vmatprep.subr.mxu0 %v940
  %1166 = vmatpush1.msra.mxu0 %v939
  %1167 = vmatprep.subr.mxu0 %v944
  %1168 = vmatpush1.msra.mxu0 %v943
  %1169 = vmatprep.subr.mxu0 %v948
  %1170 = vmatpush1.msra.mxu0 %v947
  %1171 = vmatprep.subr.mxu0 %v952
  %1172 = vmatpush1.msra.mxu0 %v951
  %1173 = vmatprep.subr.mxu0 %v956
  %1174 = vmatpush1.msra.mxu0 %v955
  %1175 = vmatprep.subr.mxu0 %v960
  %1176 = vmatpush1.msra.mxu0 %v959
  %1177 = vmatprep.mubr.f32.mxu0 %v708
  %1178 = vmatmul.mubr.f32.gmra.mrb[0].mxu0 %v707
  %v1179 = vpop.f32.mrb[0].mxu0
  %v1180 = vadd.f32 %v1096, %v1179
  %v1181 = vpop.f32.mrb[0].mxu0
  %v1182 = vadd.f32 %v1100, %v1181
  %1183 = vmatprep.mubr.f32.mxu0 %v712
  %1184 = vmatmul.mubr.f32.gmra.mrb[0].mxu0 %v711
  %v1185 = vpop.f32.mrb[0].mxu0
  %v1186 = vadd.f32 %v1096, %v1185
  %v1187 = vpop.f32.mrb[0].mxu0
  %v1188 = vadd.f32 %v1100, %v1187
  %1189 = vmatprep.mubr.f32.mxu0 %v716
  %1190 = vmatmul.mubr.f32.gmra.mrb[0].mxu0 %v715
  %v1191 = vpop.f32.mrb[0].mxu0
  %v1192 = vadd.f32 %v1096, %v1191
  %v1193 = vpop.f32.mrb[0].mxu0
  %v1194 = vadd.f32 %v1100, %v1193
  %1195 = vmatprep.mubr.f32.mxu0 %v720
  %1196 = vmatmul.mubr.f32.gmra.mrb[0].mxu0 %v719
  %v1197 = vpop.f32.mrb[0].mxu0
  %v1198 = vadd.f32 %v1096, %v1197
  %v1199 = vpop.f32.mrb[0].mxu0
  %v1200 = vadd.f32 %v1100, %v1199
  %1201 = vmatprep.mubr.f32.mxu0 %v724
  %1202 = vmatmul.mubr.f32.gmra.mrb[0].mxu0 %v723
  %v1203 = vpop.f32.mrb[0].mxu0
  %v1204 = vadd.f32 %v1096, %v1203
  %v1205 = vpop.f32.mrb[0].mxu0
  %v1206 = vadd.f32 %v1100, %v1205
  %1207 = vmatprep.mubr.f32.mxu0 %v728
  %1208 = vmatmul.mubr.f32.gmra.mrb[0].mxu0 %v727
  %v1209 = vpop.f32.mrb[0].mxu0
  %v1210 = vadd.f32 %v1096, %v1209
  %v1211 = vpop.f32.mrb[0].mxu0
  %v1212 = vadd.f32 %v1100, %v1211
  %1213 = vmatprep.mubr.f32.mxu0 %v732
  %1214 = vmatmul.mubr.f32.gmra.mrb[0].mxu0 %v731
  %v1215 = vpop.f32.mrb[0].mxu0
  %v1216 = vadd.f32 %v1096, %v1215
  %v1217 = vpop.f32.mrb[0].mxu0
  %v1218 = vadd.f32 %v1100, %v1217
  %1219 = vmatprep.mubr.f32.mxu0 %v736
  %1220 = vmatmul.mubr.f32.gmra.mrb[0].mxu0 %v735
  %v1221 = vpop.f32.mrb[0].mxu0
  %v1222 = vadd.f32 %v1096, %v1221
  %v1223 = vpop.f32.mrb[0].mxu0
  %v1224 = vadd.f32 %v1100, %v1223
  %1225 = vmatprep.mubr.f32.mxu0 %v740
  %1226 = vmatmul.mubr.f32.gmra.mrb[0].mxu0 %v739
  %v1227 = vpop.f32.mrb[0].mxu0
  %v1228 = vadd.f32 %v1096, %v1227
  %v1229 = vpop.f32.mrb[0].mxu0
  %v1230 = vadd.f32 %v1100, %v1229
  %1231 = vmatprep.mubr.f32.mxu0 %v744
  %1232 = vmatmul.mubr.f32.gmra.mrb[0].mxu0 %v743
  %v1233 = vpop.f32.mrb[0].mxu0
  %v1234 = vadd.f32 %v1096, %v1233
  %v1235 = vpop.f32.mrb[0].mxu0
  %v1236 = vadd.f32 %v1100, %v1235
  %1237 = vmatprep.mubr.f32.mxu0 %v748
  %1238 = vmatmul.mubr.f32.gmra.mrb[0].mxu0 %v747
  %v1239 = vpop.f32.mrb[0].mxu0
  %v1240 = vadd.f32 %v1096, %v1239
  %v1241 = vpop.f32.mrb[0].mxu0
  %v1242 = vadd.f32 %v1100, %v1241
  %1243 = vmatprep.mubr.f32.mxu0 %v752
  %1244 = vmatmul.mubr.f32.gmra.mrb[0].mxu0 %v751
  %v1245 = vpop.f32.mrb[0].mxu0
  %v1246 = vadd.f32 %v1096, %v1245
  %v1247 = vpop.f32.mrb[0].mxu0
  %v1248 = vadd.f32 %v1100, %v1247
  %1249 = vmatprep.mubr.f32.mxu0 %v756
  %1250 = vmatmul.mubr.f32.gmra.mrb[0].mxu0 %v755
  %v1251 = vpop.f32.mrb[0].mxu0
  %v1252 = vadd.f32 %v1096, %v1251
  %v1253 = vpop.f32.mrb[0].mxu0
  %v1254 = vadd.f32 %v1100, %v1253
  %1255 = vmatprep.mubr.f32.mxu0 %v760
  %1256 = vmatmul.mubr.f32.gmra.mrb[0].mxu0 %v759
  %v1257 = vpop.f32.mrb[0].mxu0
  %v1258 = vadd.f32 %v1096, %v1257
  %v1259 = vpop.f32.mrb[0].mxu0
  %v1260 = vadd.f32 %v1100, %v1259
  %1261 = vmatprep.mubr.f32.mxu0 %v764
  %1262 = vmatmul.mubr.f32.gmra.mrb[0].mxu0 %v763
  %v1263 = vpop.f32.mrb[0].mxu0
  %v1264 = vadd.f32 %v1096, %v1263
  %v1265 = vpop.f32.mrb[0].mxu0
  %v1266 = vadd.f32 %v1100, %v1265
  %1267 = vmatprep.mubr.f32.mxu0 %v768
  %1268 = vmatmul.mubr.f32.gmra.mrb[0].mxu0 %v767
  %v1269 = vpop.f32.mrb[0].mxu0
  %v1270 = vadd.f32 %v1096, %v1269
  %v1271 = vpop.f32.mrb[0].mxu0
  %v1272 = vadd.f32 %v1100, %v1271
  %1273 = vmatprep.mubr.f32.mxu0 %v772
  %1274 = vmatmul.mubr.f32.gmra.mrb[0].mxu0 %v771
  %v1275 = vpop.f32.mrb[0].mxu0
  %v1276 = vadd.f32 %v1096, %v1275
  %v1277 = vpop.f32.mrb[0].mxu0
  %v1278 = vadd.f32 %v1100, %v1277
  %1279 = vmatprep.mubr.f32.mxu0 %v776
  %1280 = vmatmul.mubr.f32.gmra.mrb[0].mxu0 %v775
  %v1281 = vpop.f32.mrb[0].mxu0
  %v1282 = vadd.f32 %v1096, %v1281
  %v1283 = vpop.f32.mrb[0].mxu0
  %v1284 = vadd.f32 %v1100, %v1283
  %1285 = vmatprep.mubr.f32.mxu0 %v780
  %1286 = vmatmul.mubr.f32.gmra.mrb[0].mxu0 %v779
  %v1287 = vpop.f32.mrb[0].mxu0
  %v1288 = vadd.f32 %v1096, %v1287
  %v1289 = vpop.f32.mrb[0].mxu0
  %v1290 = vadd.f32 %v1100, %v1289
  %1291 = vmatprep.mubr.f32.mxu0 %v784
  %1292 = vmatmul.mubr.f32.gmra.mrb[0].mxu0 %v783
  %v1293 = vpop.f32.mrb[0].mxu0
  %v1294 = vadd.f32 %v1096, %v1293
  %v1295 = vpop.f32.mrb[0].mxu0
  %v1296 = vadd.f32 %v1100, %v1295
  %1297 = vmatprep.mubr.f32.mxu0 %v788
  %1298 = vmatmul.mubr.f32.gmra.mrb[0].mxu0 %v787
  %v1299 = vpop.f32.mrb[0].mxu0
  %v1300 = vadd.f32 %v1096, %v1299
  %v1301 = vpop.f32.mrb[0].mxu0
  %v1302 = vadd.f32 %v1100, %v1301
  %1303 = vmatprep.mubr.f32.mxu0 %v792
  %1304 = vmatmul.mubr.f32.gmra.mrb[0].mxu0 %v791
  %v1305 = vpop.f32.mrb[0].mxu0
  %v1306 = vadd.f32 %v1096, %v1305
  %v1307 = vpop.f32.mrb[0].mxu0
  %v1308 = vadd.f32 %v1100, %v1307
  %1309 = vmatprep.mubr.f32.mxu0 %v796
  %1310 = vmatmul.mubr.f32.gmra.mrb[0].mxu0 %v795
  %v1311 = vpop.f32.mrb[0].mxu0
  %v1312 = vadd.f32 %v1096, %v1311
  %v1313 = vpop.f32.mrb[0].mxu0
  %v1314 = vadd.f32 %v1100, %v1313
  %1315 = vmatprep.mubr.f32.mxu0 %v800
  %1316 = vmatmul.mubr.f32.gmra.mrb[0].mxu0 %v799
  %v1317 = vpop.f32.mrb[0].mxu0
  %v1318 = vadd.f32 %v1096, %v1317
  %v1319 = vpop.f32.mrb[0].mxu0
  %v1320 = vadd.f32 %v1100, %v1319
  %1321 = vmatprep.mubr.f32.mxu0 %v804
  %1322 = vmatmul.mubr.f32.gmra.mrb[0].mxu0 %v803
  %v1323 = vpop.f32.mrb[0].mxu0
  %v1324 = vadd.f32 %v1096, %v1323
  %v1325 = vpop.f32.mrb[0].mxu0
  %v1326 = vadd.f32 %v1100, %v1325
  %1327 = vmatprep.mubr.f32.mxu0 %v808
  %1328 = vmatmul.mubr.f32.gmra.mrb[0].mxu0 %v807
  %v1329 = vpop.f32.mrb[0].mxu0
  %v1330 = vadd.f32 %v1096, %v1329
  %v1331 = vpop.f32.mrb[0].mxu0
  %v1332 = vadd.f32 %v1100, %v1331
  %1333 = vmatprep.mubr.f32.mxu0 %v812
  %1334 = vmatmul.mubr.f32.gmra.mrb[0].mxu0 %v811
  %v1335 = vpop.f32.mrb[0].mxu0
  %v1336 = vadd.f32 %v1096, %v1335
  %v1337 = vpop.f32.mrb[0].mxu0
  %v1338 = vadd.f32 %v1100, %v1337
  %1339 = vmatprep.mubr.f32.mxu0 %v816
  %1340 = vmatmul.mubr.f32.gmra.mrb[0].mxu0 %v815
  %v1341 = vpop.f32.mrb[0].mxu0
  %v1342 = vadd.f32 %v1096, %v1341
  %v1343 = vpop.f32.mrb[0].mxu0
  %v1344 = vadd.f32 %v1100, %v1343
  %1345 = vmatprep.mubr.f32.mxu0 %v820
  %1346 = vmatmul.mubr.f32.gmra.mrb[0].mxu0 %v819
  %v1347 = vpop.f32.mrb[0].mxu0
  %v1348 = vadd.f32 %v1096, %v1347
  %v1349 = vpop.f32.mrb[0].mxu0
  %v1350 = vadd.f32 %v1100, %v1349
  %1351 = vmatprep.mubr.f32.mxu0 %v824
  %1352 = vmatmul.mubr.f32.gmra.mrb[0].mxu0 %v823
  %v1353 = vpop.f32.mrb[0].mxu0
  %v1354 = vadd.f32 %v1096, %v1353
  %v1355 = vpop.f32.mrb[0].mxu0
  %v1356 = vadd.f32 %v1100, %v1355
  %1357 = vmatprep.mubr.f32.mxu0 %v828
  %1358 = vmatmul.mubr.f32.gmra.mrb[0].mxu0 %v827
  %v1359 = vpop.f32.mrb[0].mxu0
  %v1360 = vadd.f32 %v1096, %v1359
  %v1361 = vpop.f32.mrb[0].mxu0
  %v1362 = vadd.f32 %v1100, %v1361
  %1363 = vmatprep.mubr.f32.mxu0 %v832
  %1364 = vmatmul.mubr.f32.gmra.mrb[0].mxu0 %v831
  %v1365 = vpop.f32.mrb[0].mxu0
  %v1366 = vadd.f32 %v1096, %v1365
  %v1367 = vpop.f32.mrb[0].mxu0
  %v1368 = vadd.f32 %v1100, %v1367
  %1369 = vdwg.mxu0
  %1370 = vmatprep.subr.mxu0 %v964
  %1371 = vmatpush1.msra.mxu0 %v963
  %1372 = vmatprep.subr.mxu0 %v968
  %1373 = vmatpush1.msra.mxu0 %v967
  %1374 = vmatprep.subr.mxu0 %v972
  %1375 = vmatpush1.msra.mxu0 %v971
  %1376 = vmatprep.subr.mxu0 %v976
  %1377 = vmatpush1.msra.mxu0 %v975
  %1378 = vmatprep.subr.mxu0 %v980
  %1379 = vmatpush1.msra.mxu0 %v979
  %1380 = vmatprep.subr.mxu0 %v984
  %1381 = vmatpush1.msra.mxu0 %v983
  %1382 = vmatprep.subr.mxu0 %v988
  %1383 = vmatpush1.msra.mxu0 %v987
  %1384 = vmatprep.subr.mxu0 %v992
  %1385 = vmatpush1.msra.mxu0 %v991
  %1386 = vmatprep.subr.mxu0 %v996
  %1387 = vmatpush1.msra.mxu0 %v995
  %1388 = vmatprep.subr.mxu0 %v1000
  %1389 = vmatpush1.msra.mxu0 %v999
  %1390 = vmatprep.subr.mxu0 %v1004
  %1391 = vmatpush1.msra.mxu0 %v1003
  %1392 = vmatprep.subr.mxu0 %v1008
  %1393 = vmatpush1.msra.mxu0 %v1007
  %1394 = vmatprep.subr.mxu0 %v1012
  %1395 = vmatpush1.msra.mxu0 %v1011
  %1396 = vmatprep.subr.mxu0 %v1016
  %1397 = vmatpush1.msra.mxu0 %v1015
  %1398 = vmatprep.subr.mxu0 %v1020
  %1399 = vmatpush1.msra.mxu0 %v1019
  %1400 = vmatprep.subr.mxu0 %v1024
  %1401 = vmatpush1.msra.mxu0 %v1023
  %1402 = vmatprep.subr.mxu0 %v1028
  %1403 = vmatpush1.msra.mxu0 %v1027
  %1404 = vmatprep.subr.mxu0 %v1032
  %1405 = vmatpush1.msra.mxu0 %v1031
  %1406 = vmatprep.subr.mxu0 %v1036
  %1407 = vmatpush1.msra.mxu0 %v1035
  %1408 = vmatprep.subr.mxu0 %v1040
  %1409 = vmatpush1.msra.mxu0 %v1039
  %1410 = vmatprep.subr.mxu0 %v1044
  %1411 = vmatpush1.msra.mxu0 %v1043
  %1412 = vmatprep.subr.mxu0 %v1048
  %1413 = vmatpush1.msra.mxu0 %v1047
  %1414 = vmatprep.subr.mxu0 %v1052
  %1415 = vmatpush1.msra.mxu0 %v1051
  %1416 = vmatprep.subr.mxu0 %v1056
  %1417 = vmatpush1.msra.mxu0 %v1055
  %1418 = vmatprep.subr.mxu0 %v1060
  %1419 = vmatpush1.msra.mxu0 %v1059
  %1420 = vmatprep.subr.mxu0 %v1064
  %1421 = vmatpush1.msra.mxu0 %v1063
  %1422 = vmatprep.subr.mxu0 %v1068
  %1423 = vmatpush1.msra.mxu0 %v1067
  %1424 = vmatprep.subr.mxu0 %v1072
  %1425 = vmatpush1.msra.mxu0 %v1071
  %1426 = vmatprep.subr.mxu0 %v1076
  %1427 = vmatpush1.msra.mxu0 %v1075
  %1428 = vmatprep.subr.mxu0 %v1080
  %1429 = vmatpush1.msra.mxu0 %v1079
  %1430 = vmatprep.subr.mxu0 %v1084
  %1431 = vmatpush1.msra.mxu0 %v1083
  %1432 = vmatprep.subr.mxu0 %v1088
  %1433 = vmatpush1.msra.mxu0 %v1087
  %1434 = vmatprep.mubr.f32.mxu0 %v710
  %1435 = vmatmul.mubr.f32.gmra.mrb[0].mxu0 %v709
  %v1436 = vpop.f32.mrb[0].mxu0
  %v1437 = vadd.f32 %v1180, %v1436
  %v1438 = vpop.f32.mrb[0].mxu0
  %v1439 = vadd.f32 %v1182, %v1438
  %1440 = vmatprep.mubr.f32.mxu0 %v714
  %1441 = vmatmul.mubr.f32.gmra.mrb[0].mxu0 %v713
  %v1442 = vpop.f32.mrb[0].mxu0
  %v1443 = vadd.f32 %v1186, %v1442
  %v1444 = vpop.f32.mrb[0].mxu0
  %v1445 = vadd.f32 %v1188, %v1444
  %1446 = vmatprep.mubr.f32.mxu0 %v718
  %1447 = vmatmul.mubr.f32.gmra.mrb[0].mxu0 %v717
  %v1448 = vpop.f32.mrb[0].mxu0
  %v1449 = vadd.f32 %v1192, %v1448
  %v1450 = vpop.f32.mrb[0].mxu0
  %v1451 = vadd.f32 %v1194, %v1450
  %1452 = vmatprep.mubr.f32.mxu0 %v722
  %1453 = vmatmul.mubr.f32.gmra.mrb[0].mxu0 %v721
  %v1454 = vpop.f32.mrb[0].mxu0
  %v1455 = vadd.f32 %v1198, %v1454
  %v1456 = vpop.f32.mrb[0].mxu0
  %v1457 = vadd.f32 %v1200, %v1456
  %1458 = vmatprep.mubr.f32.mxu0 %v726
  %1459 = vmatmul.mubr.f32.gmra.mrb[0].mxu0 %v725
  %v1460 = vpop.f32.mrb[0].mxu0
  %v1461 = vadd.f32 %v1204, %v1460
  %v1462 = vpop.f32.mrb[0].mxu0
  %v1463 = vadd.f32 %v1206, %v1462
  %1464 = vmatprep.mubr.f32.mxu0 %v730
  %1465 = vmatmul.mubr.f32.gmra.mrb[0].mxu0 %v729
  %v1466 = vpop.f32.mrb[0].mxu0
  %v1467 = vadd.f32 %v1210, %v1466
  %v1468 = vpop.f32.mrb[0].mxu0
  %v1469 = vadd.f32 %v1212, %v1468
  %1470 = vmatprep.mubr.f32.mxu0 %v734
  %1471 = vmatmul.mubr.f32.gmra.mrb[0].mxu0 %v733
  %v1472 = vpop.f32.mrb[0].mxu0
  %v1473 = vadd.f32 %v1216, %v1472
  %v1474 = vpop.f32.mrb[0].mxu0
  %v1475 = vadd.f32 %v1218, %v1474
  %1476 = vmatprep.mubr.f32.mxu0 %v738
  %1477 = vmatmul.mubr.f32.gmra.mrb[0].mxu0 %v737
  %v1478 = vpop.f32.mrb[0].mxu0
  %v1479 = vadd.f32 %v1222, %v1478
  %v1480 = vpop.f32.mrb[0].mxu0
  %v1481 = vadd.f32 %v1224, %v1480
  %1482 = vmatprep.mubr.f32.mxu0 %v742
  %1483 = vmatmul.mubr.f32.gmra.mrb[0].mxu0 %v741
  %v1484 = vpop.f32.mrb[0].mxu0
  %v1485 = vadd.f32 %v1228, %v1484
  %v1486 = vpop.f32.mrb[0].mxu0
  %v1487 = vadd.f32 %v1230, %v1486
  %1488 = vmatprep.mubr.f32.mxu0 %v746
  %1489 = vmatmul.mubr.f32.gmra.mrb[0].mxu0 %v745
  %v1490 = vpop.f32.mrb[0].mxu0
  %v1491 = vadd.f32 %v1234, %v1490
  %v1492 = vpop.f32.mrb[0].mxu0
  %v1493 = vadd.f32 %v1236, %v1492
  %1494 = vmatprep.mubr.f32.mxu0 %v750
  %1495 = vmatmul.mubr.f32.gmra.mrb[0].mxu0 %v749
  %v1496 = vpop.f32.mrb[0].mxu0
  %v1497 = vadd.f32 %v1240, %v1496
  %v1498 = vpop.f32.mrb[0].mxu0
  %v1499 = vadd.f32 %v1242, %v1498
  %1500 = vmatprep.mubr.f32.mxu0 %v754
  %1501 = vmatmul.mubr.f32.gmra.mrb[0].mxu0 %v753
  %v1502 = vpop.f32.mrb[0].mxu0
  %v1503 = vadd.f32 %v1246, %v1502
  %v1504 = vpop.f32.mrb[0].mxu0
  %v1505 = vadd.f32 %v1248, %v1504
  %1506 = vmatprep.mubr.f32.mxu0 %v758
  %1507 = vmatmul.mubr.f32.gmra.mrb[0].mxu0 %v757
  %v1508 = vpop.f32.mrb[0].mxu0
  %v1509 = vadd.f32 %v1252, %v1508
  %v1510 = vpop.f32.mrb[0].mxu0
  %v1511 = vadd.f32 %v1254, %v1510
  %1512 = vmatprep.mubr.f32.mxu0 %v762
  %1513 = vmatmul.mubr.f32.gmra.mrb[0].mxu0 %v761
  %v1514 = vpop.f32.mrb[0].mxu0
  %v1515 = vadd.f32 %v1258, %v1514
  %v1516 = vpop.f32.mrb[0].mxu0
  %v1517 = vadd.f32 %v1260, %v1516
  %1518 = vmatprep.mubr.f32.mxu0 %v766
  %1519 = vmatmul.mubr.f32.gmra.mrb[0].mxu0 %v765
  %v1520 = vpop.f32.mrb[0].mxu0
  %v1521 = vadd.f32 %v1264, %v1520
  %v1522 = vpop.f32.mrb[0].mxu0
  %v1523 = vadd.f32 %v1266, %v1522
  %1524 = vmatprep.mubr.f32.mxu0 %v770
  %1525 = vmatmul.mubr.f32.gmra.mrb[0].mxu0 %v769
  %v1526 = vpop.f32.mrb[0].mxu0
  %v1527 = vadd.f32 %v1270, %v1526
  %v1528 = vpop.f32.mrb[0].mxu0
  %v1529 = vadd.f32 %v1272, %v1528
  %1530 = vmatprep.mubr.f32.mxu0 %v774
  %1531 = vmatmul.mubr.f32.gmra.mrb[0].mxu0 %v773
  %v1532 = vpop.f32.mrb[0].mxu0
  %v1533 = vadd.f32 %v1276, %v1532
  %v1534 = vpop.f32.mrb[0].mxu0
  %v1535 = vadd.f32 %v1278, %v1534
  %1536 = vmatprep.mubr.f32.mxu0 %v778
  %1537 = vmatmul.mubr.f32.gmra.mrb[0].mxu0 %v777
  %v1538 = vpop.f32.mrb[0].mxu0
  %v1539 = vadd.f32 %v1282, %v1538
  %v1540 = vpop.f32.mrb[0].mxu0
  %v1541 = vadd.f32 %v1284, %v1540
  %1542 = vmatprep.mubr.f32.mxu0 %v782
  %1543 = vmatmul.mubr.f32.gmra.mrb[0].mxu0 %v781
  %v1544 = vpop.f32.mrb[0].mxu0
  %v1545 = vadd.f32 %v1288, %v1544
  %v1546 = vpop.f32.mrb[0].mxu0
  %v1547 = vadd.f32 %v1290, %v1546
  %1548 = vmatprep.mubr.f32.mxu0 %v786
  %1549 = vmatmul.mubr.f32.gmra.mrb[0].mxu0 %v785
  %v1550 = vpop.f32.mrb[0].mxu0
  %v1551 = vadd.f32 %v1294, %v1550
  %v1552 = vpop.f32.mrb[0].mxu0
  %v1553 = vadd.f32 %v1296, %v1552
  %1554 = vmatprep.mubr.f32.mxu0 %v790
  %1555 = vmatmul.mubr.f32.gmra.mrb[0].mxu0 %v789
  %v1556 = vpop.f32.mrb[0].mxu0
  %v1557 = vadd.f32 %v1300, %v1556
  %v1558 = vpop.f32.mrb[0].mxu0
  %v1559 = vadd.f32 %v1302, %v1558
  %1560 = vmatprep.mubr.f32.mxu0 %v794
  %1561 = vmatmul.mubr.f32.gmra.mrb[0].mxu0 %v793
  %v1562 = vpop.f32.mrb[0].mxu0
  %v1563 = vadd.f32 %v1306, %v1562
  %v1564 = vpop.f32.mrb[0].mxu0
  %v1565 = vadd.f32 %v1308, %v1564
  %1566 = vmatprep.mubr.f32.mxu0 %v798
  %1567 = vmatmul.mubr.f32.gmra.mrb[0].mxu0 %v797
  %v1568 = vpop.f32.mrb[0].mxu0
  %v1569 = vadd.f32 %v1312, %v1568
  %v1570 = vpop.f32.mrb[0].mxu0
  %v1571 = vadd.f32 %v1314, %v1570
  %1572 = vmatprep.mubr.f32.mxu0 %v802
  %1573 = vmatmul.mubr.f32.gmra.mrb[0].mxu0 %v801
  %v1574 = vpop.f32.mrb[0].mxu0
  %v1575 = vadd.f32 %v1318, %v1574
  %v1576 = vpop.f32.mrb[0].mxu0
  %v1577 = vadd.f32 %v1320, %v1576
  %1578 = vmatprep.mubr.f32.mxu0 %v806
  %1579 = vmatmul.mubr.f32.gmra.mrb[0].mxu0 %v805
  %v1580 = vpop.f32.mrb[0].mxu0
  %v1581 = vadd.f32 %v1324, %v1580
  %v1582 = vpop.f32.mrb[0].mxu0
  %v1583 = vadd.f32 %v1326, %v1582
  %1584 = vmatprep.mubr.f32.mxu0 %v810
  %1585 = vmatmul.mubr.f32.gmra.mrb[0].mxu0 %v809
  %v1586 = vpop.f32.mrb[0].mxu0
  %v1587 = vadd.f32 %v1330, %v1586
  %v1588 = vpop.f32.mrb[0].mxu0
  %v1589 = vadd.f32 %v1332, %v1588
  %1590 = vmatprep.mubr.f32.mxu0 %v814
  %1591 = vmatmul.mubr.f32.gmra.mrb[0].mxu0 %v813
  %v1592 = vpop.f32.mrb[0].mxu0
  %v1593 = vadd.f32 %v1336, %v1592
  %v1594 = vpop.f32.mrb[0].mxu0
  %v1595 = vadd.f32 %v1338, %v1594
  %1596 = vmatprep.mubr.f32.mxu0 %v818
  %1597 = vmatmul.mubr.f32.gmra.mrb[0].mxu0 %v817
  %v1598 = vpop.f32.mrb[0].mxu0
  %v1599 = vadd.f32 %v1342, %v1598
  %v1600 = vpop.f32.mrb[0].mxu0
  %v1601 = vadd.f32 %v1344, %v1600
  %1602 = vmatprep.mubr.f32.mxu0 %v822
  %1603 = vmatmul.mubr.f32.gmra.mrb[0].mxu0 %v821
  %v1604 = vpop.f32.mrb[0].mxu0
  %v1605 = vadd.f32 %v1348, %v1604
  %v1606 = vpop.f32.mrb[0].mxu0
  %v1607 = vadd.f32 %v1350, %v1606
  %1608 = vmatprep.mubr.f32.mxu0 %v826
  %1609 = vmatmul.mubr.f32.gmra.mrb[0].mxu0 %v825
  %v1610 = vpop.f32.mrb[0].mxu0
  %v1611 = vadd.f32 %v1354, %v1610
  %v1612 = vpop.f32.mrb[0].mxu0
  %v1613 = vadd.f32 %v1356, %v1612
  %1614 = vmatprep.mubr.f32.mxu0 %v830
  %1615 = vmatmul.mubr.f32.gmra.mrb[0].mxu0 %v829
  %v1616 = vpop.f32.mrb[0].mxu0
  %v1617 = vadd.f32 %v1360, %v1616
  %v1618 = vpop.f32.mrb[0].mxu0
  %v1619 = vadd.f32 %v1362, %v1618
  %1620 = vmatprep.mubr.f32.mxu0 %v834
  %1621 = vmatmul.mubr.f32.gmra.mrb[0].mxu0 %v833
  %v1622 = vpop.f32.mrb[0].mxu0
  %v1623 = vadd.f32 %v1366, %v1622
  %v1624 = vpop.f32.mrb[0].mxu0
  %v1625 = vadd.f32 %v1368, %v1624
  %1626 = vdwg.mxu0
  %1627 = vmatprep.subr.mxu0 %v838
  %1628 = vmatpush1.msra.mxu0 %v837
  %1629 = vmatprep.subr.mxu0 %v842
  %1630 = vmatpush1.msra.mxu0 %v841
  %1631 = vmatprep.subr.mxu0 %v846
  %1632 = vmatpush1.msra.mxu0 %v845
  %1633 = vmatprep.subr.mxu0 %v850
  %1634 = vmatpush1.msra.mxu0 %v849
  %1635 = vmatprep.subr.mxu0 %v854
  %1636 = vmatpush1.msra.mxu0 %v853
  %1637 = vmatprep.subr.mxu0 %v858
  %1638 = vmatpush1.msra.mxu0 %v857
  %1639 = vmatprep.subr.mxu0 %v862
  %1640 = vmatpush1.msra.mxu0 %v861
  %1641 = vmatprep.subr.mxu0 %v866
  %1642 = vmatpush1.msra.mxu0 %v865
  %1643 = vmatprep.subr.mxu0 %v870
  %1644 = vmatpush1.msra.mxu0 %v869
  %1645 = vmatprep.subr.mxu0 %v874
  %1646 = vmatpush1.msra.mxu0 %v873
  %1647 = vmatprep.subr.mxu0 %v878
  %1648 = vmatpush1.msra.mxu0 %v877
  %1649 = vmatprep.subr.mxu0 %v882
  %1650 = vmatpush1.msra.mxu0 %v881
  %1651 = vmatprep.subr.mxu0 %v886
  %1652 = vmatpush1.msra.mxu0 %v885
  %1653 = vmatprep.subr.mxu0 %v890
  %1654 = vmatpush1.msra.mxu0 %v889
  %1655 = vmatprep.subr.mxu0 %v894
  %1656 = vmatpush1.msra.mxu0 %v893
  %1657 = vmatprep.subr.mxu0 %v898
  %1658 = vmatpush1.msra.mxu0 %v897
  %1659 = vmatprep.subr.mxu0 %v902
  %1660 = vmatpush1.msra.mxu0 %v901
  %1661 = vmatprep.subr.mxu0 %v906
  %1662 = vmatpush1.msra.mxu0 %v905
  %1663 = vmatprep.subr.mxu0 %v910
  %1664 = vmatpush1.msra.mxu0 %v909
  %1665 = vmatprep.subr.mxu0 %v914
  %1666 = vmatpush1.msra.mxu0 %v913
  %1667 = vmatprep.subr.mxu0 %v918
  %1668 = vmatpush1.msra.mxu0 %v917
  %1669 = vmatprep.subr.mxu0 %v922
  %1670 = vmatpush1.msra.mxu0 %v921
  %1671 = vmatprep.subr.mxu0 %v926
  %1672 = vmatpush1.msra.mxu0 %v925
  %1673 = vmatprep.subr.mxu0 %v930
  %1674 = vmatpush1.msra.mxu0 %v929
  %1675 = vmatprep.subr.mxu0 %v934
  %1676 = vmatpush1.msra.mxu0 %v933
  %1677 = vmatprep.subr.mxu0 %v938
  %1678 = vmatpush1.msra.mxu0 %v937
  %1679 = vmatprep.subr.mxu0 %v942
  %1680 = vmatpush1.msra.mxu0 %v941
  %1681 = vmatprep.subr.mxu0 %v946
  %1682 = vmatpush1.msra.mxu0 %v945
  %1683 = vmatprep.subr.mxu0 %v950
  %1684 = vmatpush1.msra.mxu0 %v949
  %1685 = vmatprep.subr.mxu0 %v954
  %1686 = vmatpush1.msra.mxu0 %v953
  %1687 = vmatprep.subr.mxu0 %v958
  %1688 = vmatpush1.msra.mxu0 %v957
  %1689 = vmatprep.subr.mxu0 %v962
  %1690 = vmatpush1.msra.mxu0 %v961
  %1691 = vmatprep.mubr.f32.mxu0 %v708
  %1692 = vmatmul.mubr.f32.gmra.mrb[0].mxu0 %v707
  %v1693 = vpop.f32.mrb[0].mxu0
  %v1694 = vadd.f32 %v1104, %v1693
  %v1695 = vpop.f32.mrb[0].mxu0
  %v1696 = vadd.f32 %v1108, %v1695
  %1697 = vmatprep.mubr.f32.mxu0 %v712
  %1698 = vmatmul.mubr.f32.gmra.mrb[0].mxu0 %v711
  %v1699 = vpop.f32.mrb[0].mxu0
  %v1700 = vadd.f32 %v1104, %v1699
  %v1701 = vpop.f32.mrb[0].mxu0
  %v1702 = vadd.f32 %v1108, %v1701
  %1703 = vmatprep.mubr.f32.mxu0 %v716
  %1704 = vmatmul.mubr.f32.gmra.mrb[0].mxu0 %v715
  %v1705 = vpop.f32.mrb[0].mxu0
  %v1706 = vadd.f32 %v1104, %v1705
  %v1707 = vpop.f32.mrb[0].mxu0
  %v1708 = vadd.f32 %v1108, %v1707
  %1709 = vmatprep.mubr.f32.mxu0 %v720
  %1710 = vmatmul.mubr.f32.gmra.mrb[0].mxu0 %v719
  %v1711 = vpop.f32.mrb[0].mxu0
  %v1712 = vadd.f32 %v1104, %v1711
  %v1713 = vpop.f32.mrb[0].mxu0
  %v1714 = vadd.f32 %v1108, %v1713
  %1715 = vmatprep.mubr.f32.mxu0 %v724
  %1716 = vmatmul.mubr.f32.gmra.mrb[0].mxu0 %v723
  %v1717 = vpop.f32.mrb[0].mxu0
  %v1718 = vadd.f32 %v1104, %v1717
  %v1719 = vpop.f32.mrb[0].mxu0
  %v1720 = vadd.f32 %v1108, %v1719
  %1721 = vmatprep.mubr.f32.mxu0 %v728
  %1722 = vmatmul.mubr.f32.gmra.mrb[0].mxu0 %v727
  %v1723 = vpop.f32.mrb[0].mxu0
  %v1724 = vadd.f32 %v1104, %v1723
  %v1725 = vpop.f32.mrb[0].mxu0
  %v1726 = vadd.f32 %v1108, %v1725
  %1727 = vmatprep.mubr.f32.mxu0 %v732
  %1728 = vmatmul.mubr.f32.gmra.mrb[0].mxu0 %v731
  %v1729 = vpop.f32.mrb[0].mxu0
  %v1730 = vadd.f32 %v1104, %v1729
  %v1731 = vpop.f32.mrb[0].mxu0
  %v1732 = vadd.f32 %v1108, %v1731
  %1733 = vmatprep.mubr.f32.mxu0 %v736
  %1734 = vmatmul.mubr.f32.gmra.mrb[0].mxu0 %v735
  %v1735 = vpop.f32.mrb[0].mxu0
  %v1736 = vadd.f32 %v1104, %v1735
  %v1737 = vpop.f32.mrb[0].mxu0
  %v1738 = vadd.f32 %v1108, %v1737
  %1739 = vmatprep.mubr.f32.mxu0 %v740
  %1740 = vmatmul.mubr.f32.gmra.mrb[0].mxu0 %v739
  %v1741 = vpop.f32.mrb[0].mxu0
  %v1742 = vadd.f32 %v1104, %v1741
  %v1743 = vpop.f32.mrb[0].mxu0
  %v1744 = vadd.f32 %v1108, %v1743
  %1745 = vmatprep.mubr.f32.mxu0 %v744
  %1746 = vmatmul.mubr.f32.gmra.mrb[0].mxu0 %v743
  %v1747 = vpop.f32.mrb[0].mxu0
  %v1748 = vadd.f32 %v1104, %v1747
  %v1749 = vpop.f32.mrb[0].mxu0
  %v1750 = vadd.f32 %v1108, %v1749
  %1751 = vmatprep.mubr.f32.mxu0 %v748
  %1752 = vmatmul.mubr.f32.gmra.mrb[0].mxu0 %v747
  %v1753 = vpop.f32.mrb[0].mxu0
  %v1754 = vadd.f32 %v1104, %v1753
  %v1755 = vpop.f32.mrb[0].mxu0
  %v1756 = vadd.f32 %v1108, %v1755
  %1757 = vmatprep.mubr.f32.mxu0 %v752
  %1758 = vmatmul.mubr.f32.gmra.mrb[0].mxu0 %v751
  %v1759 = vpop.f32.mrb[0].mxu0
  %v1760 = vadd.f32 %v1104, %v1759
  %v1761 = vpop.f32.mrb[0].mxu0
  %v1762 = vadd.f32 %v1108, %v1761
  %1763 = vmatprep.mubr.f32.mxu0 %v756
  %1764 = vmatmul.mubr.f32.gmra.mrb[0].mxu0 %v755
  %v1765 = vpop.f32.mrb[0].mxu0
  %v1766 = vadd.f32 %v1104, %v1765
  %v1767 = vpop.f32.mrb[0].mxu0
  %v1768 = vadd.f32 %v1108, %v1767
  %1769 = vmatprep.mubr.f32.mxu0 %v760
  %1770 = vmatmul.mubr.f32.gmra.mrb[0].mxu0 %v759
  %v1771 = vpop.f32.mrb[0].mxu0
  %v1772 = vadd.f32 %v1104, %v1771
  %v1773 = vpop.f32.mrb[0].mxu0
  %v1774 = vadd.f32 %v1108, %v1773
  %1775 = vmatprep.mubr.f32.mxu0 %v764
  %1776 = vmatmul.mubr.f32.gmra.mrb[0].mxu0 %v763
  %v1777 = vpop.f32.mrb[0].mxu0
  %v1778 = vadd.f32 %v1104, %v1777
  %v1779 = vpop.f32.mrb[0].mxu0
  %v1780 = vadd.f32 %v1108, %v1779
  %1781 = vmatprep.mubr.f32.mxu0 %v768
  %1782 = vmatmul.mubr.f32.gmra.mrb[0].mxu0 %v767
  %v1783 = vpop.f32.mrb[0].mxu0
  %v1784 = vadd.f32 %v1104, %v1783
  %v1785 = vpop.f32.mrb[0].mxu0
  %v1786 = vadd.f32 %v1108, %v1785
  %1787 = vmatprep.mubr.f32.mxu0 %v772
  %1788 = vmatmul.mubr.f32.gmra.mrb[0].mxu0 %v771
  %v1789 = vpop.f32.mrb[0].mxu0
  %v1790 = vadd.f32 %v1104, %v1789
  %v1791 = vpop.f32.mrb[0].mxu0
  %v1792 = vadd.f32 %v1108, %v1791
  %1793 = vmatprep.mubr.f32.mxu0 %v776
  %1794 = vmatmul.mubr.f32.gmra.mrb[0].mxu0 %v775
  %v1795 = vpop.f32.mrb[0].mxu0
  %v1796 = vadd.f32 %v1104, %v1795
  %v1797 = vpop.f32.mrb[0].mxu0
  %v1798 = vadd.f32 %v1108, %v1797
  %1799 = vmatprep.mubr.f32.mxu0 %v780
  %1800 = vmatmul.mubr.f32.gmra.mrb[0].mxu0 %v779
  %v1801 = vpop.f32.mrb[0].mxu0
  %v1802 = vadd.f32 %v1104, %v1801
  %v1803 = vpop.f32.mrb[0].mxu0
  %v1804 = vadd.f32 %v1108, %v1803
  %1805 = vmatprep.mubr.f32.mxu0 %v784
  %1806 = vmatmul.mubr.f32.gmra.mrb[0].mxu0 %v783
  %v1807 = vpop.f32.mrb[0].mxu0
  %v1808 = vadd.f32 %v1104, %v1807
  %v1809 = vpop.f32.mrb[0].mxu0
  %v1810 = vadd.f32 %v1108, %v1809
  %1811 = vmatprep.mubr.f32.mxu0 %v788
  %1812 = vmatmul.mubr.f32.gmra.mrb[0].mxu0 %v787
  %v1813 = vpop.f32.mrb[0].mxu0
  %v1814 = vadd.f32 %v1104, %v1813
  %v1815 = vpop.f32.mrb[0].mxu0
  %v1816 = vadd.f32 %v1108, %v1815
  %1817 = vmatprep.mubr.f32.mxu0 %v792
  %1818 = vmatmul.mubr.f32.gmra.mrb[0].mxu0 %v791
  %v1819 = vpop.f32.mrb[0].mxu0
  %v1820 = vadd.f32 %v1104, %v1819
  %v1821 = vpop.f32.mrb[0].mxu0
  %v1822 = vadd.f32 %v1108, %v1821
  %1823 = vmatprep.mubr.f32.mxu0 %v796
  %1824 = vmatmul.mubr.f32.gmra.mrb[0].mxu0 %v795
  %v1825 = vpop.f32.mrb[0].mxu0
  %v1826 = vadd.f32 %v1104, %v1825
  %v1827 = vpop.f32.mrb[0].mxu0
  %v1828 = vadd.f32 %v1108, %v1827
  %1829 = vmatprep.mubr.f32.mxu0 %v800
  %1830 = vmatmul.mubr.f32.gmra.mrb[0].mxu0 %v799
  %v1831 = vpop.f32.mrb[0].mxu0
  %v1832 = vadd.f32 %v1104, %v1831
  %v1833 = vpop.f32.mrb[0].mxu0
  %v1834 = vadd.f32 %v1108, %v1833
  %1835 = vmatprep.mubr.f32.mxu0 %v804
  %1836 = vmatmul.mubr.f32.gmra.mrb[0].mxu0 %v803
  %v1837 = vpop.f32.mrb[0].mxu0
  %v1838 = vadd.f32 %v1104, %v1837
  %v1839 = vpop.f32.mrb[0].mxu0
  %v1840 = vadd.f32 %v1108, %v1839
  %1841 = vmatprep.mubr.f32.mxu0 %v808
  %1842 = vmatmul.mubr.f32.gmra.mrb[0].mxu0 %v807
  %v1843 = vpop.f32.mrb[0].mxu0
  %v1844 = vadd.f32 %v1104, %v1843
  %v1845 = vpop.f32.mrb[0].mxu0
  %v1846 = vadd.f32 %v1108, %v1845
  %1847 = vmatprep.mubr.f32.mxu0 %v812
  %1848 = vmatmul.mubr.f32.gmra.mrb[0].mxu0 %v811
  %v1849 = vpop.f32.mrb[0].mxu0
  %v1850 = vadd.f32 %v1104, %v1849
  %v1851 = vpop.f32.mrb[0].mxu0
  %v1852 = vadd.f32 %v1108, %v1851
  %1853 = vmatprep.mubr.f32.mxu0 %v816
  %1854 = vmatmul.mubr.f32.gmra.mrb[0].mxu0 %v815
  %v1855 = vpop.f32.mrb[0].mxu0
  %v1856 = vadd.f32 %v1104, %v1855
  %v1857 = vpop.f32.mrb[0].mxu0
  %v1858 = vadd.f32 %v1108, %v1857
  %1859 = vmatprep.mubr.f32.mxu0 %v820
  %1860 = vmatmul.mubr.f32.gmra.mrb[0].mxu0 %v819
  %v1861 = vpop.f32.mrb[0].mxu0
  %v1862 = vadd.f32 %v1104, %v1861
  %v1863 = vpop.f32.mrb[0].mxu0
  %v1864 = vadd.f32 %v1108, %v1863
  %1865 = vmatprep.mubr.f32.mxu0 %v824
  %1866 = vmatmul.mubr.f32.gmra.mrb[0].mxu0 %v823
  %v1867 = vpop.f32.mrb[0].mxu0
  %v1868 = vadd.f32 %v1104, %v1867
  %v1869 = vpop.f32.mrb[0].mxu0
  %v1870 = vadd.f32 %v1108, %v1869
  %1871 = vmatprep.mubr.f32.mxu0 %v828
  %1872 = vmatmul.mubr.f32.gmra.mrb[0].mxu0 %v827
  %v1873 = vpop.f32.mrb[0].mxu0
  %v1874 = vadd.f32 %v1104, %v1873
  %v1875 = vpop.f32.mrb[0].mxu0
  %v1876 = vadd.f32 %v1108, %v1875
  %1877 = vmatprep.mubr.f32.mxu0 %v832
  %1878 = vmatmul.mubr.f32.gmra.mrb[0].mxu0 %v831
  %v1879 = vpop.f32.mrb[0].mxu0
  %v1880 = vadd.f32 %v1104, %v1879
  %v1881 = vpop.f32.mrb[0].mxu0
  %v1882 = vadd.f32 %v1108, %v1881
  %1883 = vdwg.mxu0
  %1884 = vmatprep.subr.mxu0 %v966
  %1885 = vmatpush1.msra.mxu0 %v965
  %1886 = vmatprep.subr.mxu0 %v970
  %1887 = vmatpush1.msra.mxu0 %v969
  %1888 = vmatprep.subr.mxu0 %v974
  %1889 = vmatpush1.msra.mxu0 %v973
  %1890 = vmatprep.subr.mxu0 %v978
  %1891 = vmatpush1.msra.mxu0 %v977
  %1892 = vmatprep.subr.mxu0 %v982
  %1893 = vmatpush1.msra.mxu0 %v981
  %1894 = vmatprep.subr.mxu0 %v986
  %1895 = vmatpush1.msra.mxu0 %v985
  %1896 = vmatprep.subr.mxu0 %v990
  %1897 = vmatpush1.msra.mxu0 %v989
  %1898 = vmatprep.subr.mxu0 %v994
  %1899 = vmatpush1.msra.mxu0 %v993
  %1900 = vmatprep.subr.mxu0 %v998
  %1901 = vmatpush1.msra.mxu0 %v997
  %1902 = vmatprep.subr.mxu0 %v1002
  %1903 = vmatpush1.msra.mxu0 %v1001
  %1904 = vmatprep.subr.mxu0 %v1006
  %1905 = vmatpush1.msra.mxu0 %v1005
  %1906 = vmatprep.subr.mxu0 %v1010
  %1907 = vmatpush1.msra.mxu0 %v1009
  %1908 = vmatprep.subr.mxu0 %v1014
  %1909 = vmatpush1.msra.mxu0 %v1013
  %1910 = vmatprep.subr.mxu0 %v1018
  %1911 = vmatpush1.msra.mxu0 %v1017
  %1912 = vmatprep.subr.mxu0 %v1022
  %1913 = vmatpush1.msra.mxu0 %v1021
  %1914 = vmatprep.subr.mxu0 %v1026
  %1915 = vmatpush1.msra.mxu0 %v1025
  %1916 = vmatprep.subr.mxu0 %v1030
  %1917 = vmatpush1.msra.mxu0 %v1029
  %1918 = vmatprep.subr.mxu0 %v1034
  %1919 = vmatpush1.msra.mxu0 %v1033
  %1920 = vmatprep.subr.mxu0 %v1038
  %1921 = vmatpush1.msra.mxu0 %v1037
  %1922 = vmatprep.subr.mxu0 %v1042
  %1923 = vmatpush1.msra.mxu0 %v1041
  %1924 = vmatprep.subr.mxu0 %v1046
  %1925 = vmatpush1.msra.mxu0 %v1045
  %1926 = vmatprep.subr.mxu0 %v1050
  %1927 = vmatpush1.msra.mxu0 %v1049
  %1928 = vmatprep.subr.mxu0 %v1054
  %1929 = vmatpush1.msra.mxu0 %v1053
  %1930 = vmatprep.subr.mxu0 %v1058
  %1931 = vmatpush1.msra.mxu0 %v1057
  %1932 = vmatprep.subr.mxu0 %v1062
  %1933 = vmatpush1.msra.mxu0 %v1061
  %1934 = vmatprep.subr.mxu0 %v1066
  %1935 = vmatpush1.msra.mxu0 %v1065
  %1936 = vmatprep.subr.mxu0 %v1070
  %1937 = vmatpush1.msra.mxu0 %v1069
  %1938 = vmatprep.subr.mxu0 %v1074
  %1939 = vmatpush1.msra.mxu0 %v1073
  %1940 = vmatprep.subr.mxu0 %v1078
  %1941 = vmatpush1.msra.mxu0 %v1077
  %1942 = vmatprep.subr.mxu0 %v1082
  %1943 = vmatpush1.msra.mxu0 %v1081
  %1944 = vmatprep.subr.mxu0 %v1086
  %1945 = vmatpush1.msra.mxu0 %v1085
  %1946 = vmatprep.subr.mxu0 %v1090
  %1947 = vmatpush1.msra.mxu0 %v1089
  %1948 = vmatprep.mubr.f32.mxu0 %v710
  %1949 = vmatmul.mubr.f32.gmra.mrb[0].mxu0 %v709
  %v1950 = vpop.f32.mrb[0].mxu0
  %v1951 = vadd.f32 %v1694, %v1950
  %v1952 = vpop.f32.mrb[0].mxu0
  %v1953 = vadd.f32 %v1696, %v1952
  %1954 = vmatprep.mubr.f32.mxu0 %v714
  %1955 = vmatmul.mubr.f32.gmra.mrb[0].mxu0 %v713
  %v1956 = vpop.f32.mrb[0].mxu0
  %v1957 = vadd.f32 %v1700, %v1956
  %v1958 = vpop.f32.mrb[0].mxu0
  %v1959 = vadd.f32 %v1702, %v1958
  %1960 = vmatprep.mubr.f32.mxu0 %v718
  %1961 = vmatmul.mubr.f32.gmra.mrb[0].mxu0 %v717
  %v1962 = vpop.f32.mrb[0].mxu0
  %v1963 = vadd.f32 %v1706, %v1962
  %v1964 = vpop.f32.mrb[0].mxu0
  %v1965 = vadd.f32 %v1708, %v1964
  %1966 = vmatprep.mubr.f32.mxu0 %v722
  %1967 = vmatmul.mubr.f32.gmra.mrb[0].mxu0 %v721
  %v1968 = vpop.f32.mrb[0].mxu0
  %v1969 = vadd.f32 %v1712, %v1968
  %v1970 = vpop.f32.mrb[0].mxu0
  %v1971 = vadd.f32 %v1714, %v1970
  %1972 = vmatprep.mubr.f32.mxu0 %v726
  %1973 = vmatmul.mubr.f32.gmra.mrb[0].mxu0 %v725
  %v1974 = vpop.f32.mrb[0].mxu0
  %v1975 = vadd.f32 %v1718, %v1974
  %v1976 = vpop.f32.mrb[0].mxu0
  %v1977 = vadd.f32 %v1720, %v1976
  %1978 = vmatprep.mubr.f32.mxu0 %v730
  %1979 = vmatmul.mubr.f32.gmra.mrb[0].mxu0 %v729
  %v1980 = vpop.f32.mrb[0].mxu0
  %v1981 = vadd.f32 %v1724, %v1980
  %v1982 = vpop.f32.mrb[0].mxu0
  %v1983 = vadd.f32 %v1726, %v1982
  %1984 = vmatprep.mubr.f32.mxu0 %v734
  %1985 = vmatmul.mubr.f32.gmra.mrb[0].mxu0 %v733
  %v1986 = vpop.f32.mrb[0].mxu0
  %v1987 = vadd.f32 %v1730, %v1986
  %v1988 = vpop.f32.mrb[0].mxu0
  %v1989 = vadd.f32 %v1732, %v1988
  %1990 = vmatprep.mubr.f32.mxu0 %v738
  %1991 = vmatmul.mubr.f32.gmra.mrb[0].mxu0 %v737
  %v1992 = vpop.f32.mrb[0].mxu0
  %v1993 = vadd.f32 %v1736, %v1992
  %v1994 = vpop.f32.mrb[0].mxu0
  %v1995 = vadd.f32 %v1738, %v1994
  %1996 = vmatprep.mubr.f32.mxu0 %v742
  %1997 = vmatmul.mubr.f32.gmra.mrb[0].mxu0 %v741
  %v1998 = vpop.f32.mrb[0].mxu0
  %v1999 = vadd.f32 %v1742, %v1998
  %v2000 = vpop.f32.mrb[0].mxu0
  %v2001 = vadd.f32 %v1744, %v2000
  %2002 = vmatprep.mubr.f32.mxu0 %v746
  %2003 = vmatmul.mubr.f32.gmra.mrb[0].mxu0 %v745
  %v2004 = vpop.f32.mrb[0].mxu0
  %v2005 = vadd.f32 %v1748, %v2004
  %v2006 = vpop.f32.mrb[0].mxu0
  %v2007 = vadd.f32 %v1750, %v2006
  %2008 = vmatprep.mubr.f32.mxu0 %v750
  %2009 = vmatmul.mubr.f32.gmra.mrb[0].mxu0 %v749
  %v2010 = vpop.f32.mrb[0].mxu0
  %v2011 = vadd.f32 %v1754, %v2010
  %v2012 = vpop.f32.mrb[0].mxu0
  %v2013 = vadd.f32 %v1756, %v2012
  %2014 = vmatprep.mubr.f32.mxu0 %v754
  %2015 = vmatmul.mubr.f32.gmra.mrb[0].mxu0 %v753
  %v2016 = vpop.f32.mrb[0].mxu0
  %v2017 = vadd.f32 %v1760, %v2016
  %v2018 = vpop.f32.mrb[0].mxu0
  %v2019 = vadd.f32 %v1762, %v2018
  %2020 = vmatprep.mubr.f32.mxu0 %v758
  %2021 = vmatmul.mubr.f32.gmra.mrb[0].mxu0 %v757
  %v2022 = vpop.f32.mrb[0].mxu0
  %v2023 = vadd.f32 %v1766, %v2022
  %v2024 = vpop.f32.mrb[0].mxu0
  %v2025 = vadd.f32 %v1768, %v2024
  %2026 = vmatprep.mubr.f32.mxu0 %v762
  %2027 = vmatmul.mubr.f32.gmra.mrb[0].mxu0 %v761
  %v2028 = vpop.f32.mrb[0].mxu0
  %v2029 = vadd.f32 %v1772, %v2028
  %v2030 = vpop.f32.mrb[0].mxu0
  %v2031 = vadd.f32 %v1774, %v2030
  %2032 = vmatprep.mubr.f32.mxu0 %v766
  %2033 = vmatmul.mubr.f32.gmra.mrb[0].mxu0 %v765
  %v2034 = vpop.f32.mrb[0].mxu0
  %v2035 = vadd.f32 %v1778, %v2034
  %v2036 = vpop.f32.mrb[0].mxu0
  %v2037 = vadd.f32 %v1780, %v2036
  %2038 = vmatprep.mubr.f32.mxu0 %v770
  %2039 = vmatmul.mubr.f32.gmra.mrb[0].mxu0 %v769
  %v2040 = vpop.f32.mrb[0].mxu0
  %v2041 = vadd.f32 %v1784, %v2040
  %v2042 = vpop.f32.mrb[0].mxu0
  %v2043 = vadd.f32 %v1786, %v2042
  %2044 = vmatprep.mubr.f32.mxu0 %v774
  %2045 = vmatmul.mubr.f32.gmra.mrb[0].mxu0 %v773
  %v2046 = vpop.f32.mrb[0].mxu0
  %v2047 = vadd.f32 %v1790, %v2046
  %v2048 = vpop.f32.mrb[0].mxu0
  %v2049 = vadd.f32 %v1792, %v2048
  %2050 = vmatprep.mubr.f32.mxu0 %v778
  %2051 = vmatmul.mubr.f32.gmra.mrb[0].mxu0 %v777
  %v2052 = vpop.f32.mrb[0].mxu0
  %v2053 = vadd.f32 %v1796, %v2052
  %v2054 = vpop.f32.mrb[0].mxu0
  %v2055 = vadd.f32 %v1798, %v2054
  %2056 = vmatprep.mubr.f32.mxu0 %v782
  %2057 = vmatmul.mubr.f32.gmra.mrb[0].mxu0 %v781
  %v2058 = vpop.f32.mrb[0].mxu0
  %v2059 = vadd.f32 %v1802, %v2058
  %v2060 = vpop.f32.mrb[0].mxu0
  %v2061 = vadd.f32 %v1804, %v2060
  %2062 = vmatprep.mubr.f32.mxu0 %v786
  %2063 = vmatmul.mubr.f32.gmra.mrb[0].mxu0 %v785
  %v2064 = vpop.f32.mrb[0].mxu0
  %v2065 = vadd.f32 %v1808, %v2064
  %v2066 = vpop.f32.mrb[0].mxu0
  %v2067 = vadd.f32 %v1810, %v2066
  %2068 = vmatprep.mubr.f32.mxu0 %v790
  %2069 = vmatmul.mubr.f32.gmra.mrb[0].mxu0 %v789
  %v2070 = vpop.f32.mrb[0].mxu0
  %v2071 = vadd.f32 %v1814, %v2070
  %v2072 = vpop.f32.mrb[0].mxu0
  %v2073 = vadd.f32 %v1816, %v2072
  %2074 = vmatprep.mubr.f32.mxu0 %v794
  %2075 = vmatmul.mubr.f32.gmra.mrb[0].mxu0 %v793
  %v2076 = vpop.f32.mrb[0].mxu0
  %v2077 = vadd.f32 %v1820, %v2076
  %v2078 = vpop.f32.mrb[0].mxu0
  %v2079 = vadd.f32 %v1822, %v2078
  %2080 = vmatprep.mubr.f32.mxu0 %v798
  %2081 = vmatmul.mubr.f32.gmra.mrb[0].mxu0 %v797
  %v2082 = vpop.f32.mrb[0].mxu0
  %v2083 = vadd.f32 %v1826, %v2082
  %v2084 = vpop.f32.mrb[0].mxu0
  %v2085 = vadd.f32 %v1828, %v2084
  %2086 = vmatprep.mubr.f32.mxu0 %v802
  %2087 = vmatmul.mubr.f32.gmra.mrb[0].mxu0 %v801
  %v2088 = vpop.f32.mrb[0].mxu0
  %v2089 = vadd.f32 %v1832, %v2088
  %v2090 = vpop.f32.mrb[0].mxu0
  %v2091 = vadd.f32 %v1834, %v2090
  %2092 = vmatprep.mubr.f32.mxu0 %v806
  %2093 = vmatmul.mubr.f32.gmra.mrb[0].mxu0 %v805
  %v2094 = vpop.f32.mrb[0].mxu0
  %v2095 = vadd.f32 %v1838, %v2094
  %v2096 = vpop.f32.mrb[0].mxu0
  %v2097 = vadd.f32 %v1840, %v2096
  %2098 = vmatprep.mubr.f32.mxu0 %v810
  %2099 = vmatmul.mubr.f32.gmra.mrb[0].mxu0 %v809
  %v2100 = vpop.f32.mrb[0].mxu0
  %v2101 = vadd.f32 %v1844, %v2100
  %v2102 = vpop.f32.mrb[0].mxu0
  %v2103 = vadd.f32 %v1846, %v2102
  %2104 = vmatprep.mubr.f32.mxu0 %v814
  %2105 = vmatmul.mubr.f32.gmra.mrb[0].mxu0 %v813
  %v2106 = vpop.f32.mrb[0].mxu0
  %v2107 = vadd.f32 %v1850, %v2106
  %v2108 = vpop.f32.mrb[0].mxu0
  %v2109 = vadd.f32 %v1852, %v2108
  %2110 = vmatprep.mubr.f32.mxu0 %v818
  %2111 = vmatmul.mubr.f32.gmra.mrb[0].mxu0 %v817
  %v2112 = vpop.f32.mrb[0].mxu0
  %v2113 = vadd.f32 %v1856, %v2112
  %v2114 = vpop.f32.mrb[0].mxu0
  %v2115 = vadd.f32 %v1858, %v2114
  %2116 = vmatprep.mubr.f32.mxu0 %v822
  %2117 = vmatmul.mubr.f32.gmra.mrb[0].mxu0 %v821
  %v2118 = vpop.f32.mrb[0].mxu0
  %v2119 = vadd.f32 %v1862, %v2118
  %v2120 = vpop.f32.mrb[0].mxu0
  %v2121 = vadd.f32 %v1864, %v2120
  %2122 = vmatprep.mubr.f32.mxu0 %v826
  %2123 = vmatmul.mubr.f32.gmra.mrb[0].mxu0 %v825
  %v2124 = vpop.f32.mrb[0].mxu0
  %v2125 = vadd.f32 %v1868, %v2124
  %v2126 = vpop.f32.mrb[0].mxu0
  %v2127 = vadd.f32 %v1870, %v2126
  %2128 = vmatprep.mubr.f32.mxu0 %v830
  %2129 = vmatmul.mubr.f32.gmra.mrb[0].mxu0 %v829
  %v2130 = vpop.f32.mrb[0].mxu0
  %v2131 = vadd.f32 %v1874, %v2130
  %v2132 = vpop.f32.mrb[0].mxu0
  %v2133 = vadd.f32 %v1876, %v2132
  %2134 = vmatprep.mubr.f32.mxu0 %v834
  %2135 = vmatmul.mubr.f32.gmra.mrb[0].mxu0 %v833
  %v2136 = vpop.f32.mrb[0].mxu0
  %v2137 = vadd.f32 %v1880, %v2136
  %v2138 = vpop.f32.mrb[0].mxu0
  %v2139 = vadd.f32 %v1882, %v2138
  %2140 = vdwg.mxu0
  %v2141 = vmax.f32 %v1437, 0.0
  %v2142 = vmax.f32 %v1439, 0.0
  %v2143 = vmax.f32 %v1951, 0.0
  %v2144 = vmax.f32 %v1953, 0.0
  %v2145 = vmax.f32 %v1443, 0.0
  %v2146 = vmax.f32 %v1445, 0.0
  %v2147 = vmax.f32 %v1957, 0.0
  %v2148 = vmax.f32 %v1959, 0.0
  %v2149 = vmax.f32 %v1449, 0.0
  %v2150 = vmax.f32 %v1451, 0.0
  %v2151 = vmax.f32 %v1963, 0.0
  %v2152 = vmax.f32 %v1965, 0.0
  %v2153 = vmax.f32 %v1455, 0.0
  %v2154 = vmax.f32 %v1457, 0.0
  %v2155 = vmax.f32 %v1969, 0.0
  %v2156 = vmax.f32 %v1971, 0.0
  %v2157 = vmax.f32 %v1461, 0.0
  %v2158 = vmax.f32 %v1463, 0.0
  %v2159 = vmax.f32 %v1975, 0.0
  %v2160 = vmax.f32 %v1977, 0.0
  %v2161 = vmax.f32 %v1467, 0.0
  %v2162 = vmax.f32 %v1469, 0.0
  %v2163 = vmax.f32 %v1981, 0.0
  %v2164 = vmax.f32 %v1983, 0.0
  %v2165 = vmax.f32 %v1473, 0.0
  %v2166 = vmax.f32 %v1475, 0.0
  %v2167 = vmax.f32 %v1987, 0.0
  %v2168 = vmax.f32 %v1989, 0.0
  %v2169 = vmax.f32 %v1479, 0.0
  %v2170 = vmax.f32 %v1481, 0.0
  %v2171 = vmax.f32 %v1993, 0.0
  %v2172 = vmax.f32 %v1995, 0.0
  %v2173 = vmax.f32 %v1485, 0.0
  %v2174 = vmax.f32 %v1487, 0.0
  %v2175 = vmax.f32 %v1999, 0.0
  %v2176 = vmax.f32 %v2001, 0.0
  %v2177 = vmax.f32 %v1491, 0.0
  %v2178 = vmax.f32 %v1493, 0.0
  %v2179 = vmax.f32 %v2005, 0.0
  %v2180 = vmax.f32 %v2007, 0.0
  %v2181 = vmax.f32 %v1497, 0.0
  %v2182 = vmax.f32 %v1499, 0.0
  %v2183 = vmax.f32 %v2011, 0.0
  %v2184 = vmax.f32 %v2013, 0.0
  %v2185 = vmax.f32 %v1503, 0.0
  %v2186 = vmax.f32 %v1505, 0.0
  %v2187 = vmax.f32 %v2017, 0.0
  %v2188 = vmax.f32 %v2019, 0.0
  %v2189 = vmax.f32 %v1509, 0.0
  %v2190 = vmax.f32 %v1511, 0.0
  %v2191 = vmax.f32 %v2023, 0.0
  %v2192 = vmax.f32 %v2025, 0.0
  %v2193 = vmax.f32 %v1515, 0.0
  %v2194 = vmax.f32 %v1517, 0.0
  %v2195 = vmax.f32 %v2029, 0.0
  %v2196 = vmax.f32 %v2031, 0.0
  %v2197 = vmax.f32 %v1521, 0.0
  %v2198 = vmax.f32 %v1523, 0.0
  %v2199 = vmax.f32 %v2035, 0.0
  %v2200 = vmax.f32 %v2037, 0.0
  %v2201 = vmax.f32 %v1527, 0.0
  %v2202 = vmax.f32 %v1529, 0.0
  %v2203 = vmax.f32 %v2041, 0.0
  %v2204 = vmax.f32 %v2043, 0.0
  %v2205 = vmax.f32 %v1533, 0.0
  %v2206 = vmax.f32 %v1535, 0.0
  %v2207 = vmax.f32 %v2047, 0.0
  %v2208 = vmax.f32 %v2049, 0.0
  %v2209 = vmax.f32 %v1539, 0.0
  %v2210 = vmax.f32 %v1541, 0.0
  %v2211 = vmax.f32 %v2053, 0.0
  %v2212 = vmax.f32 %v2055, 0.0
  %v2213 = vmax.f32 %v1545, 0.0
  %v2214 = vmax.f32 %v1547, 0.0
  %v2215 = vmax.f32 %v2059, 0.0
  %v2216 = vmax.f32 %v2061, 0.0
  %v2217 = vmax.f32 %v1551, 0.0
  %v2218 = vmax.f32 %v1553, 0.0
  %v2219 = vmax.f32 %v2065, 0.0
  %v2220 = vmax.f32 %v2067, 0.0
  %v2221 = vmax.f32 %v1557, 0.0
  %v2222 = vmax.f32 %v1559, 0.0
  %v2223 = vmax.f32 %v2071, 0.0
  %v2224 = vmax.f32 %v2073, 0.0
  %v2225 = vmax.f32 %v1563, 0.0
  %v2226 = vmax.f32 %v1565, 0.0
  %v2227 = vmax.f32 %v2077, 0.0
  %v2228 = vmax.f32 %v2079, 0.0
  %v2229 = vmax.f32 %v1569, 0.0
  %v2230 = vmax.f32 %v1571, 0.0
  %v2231 = vmax.f32 %v2083, 0.0
  %v2232 = vmax.f32 %v2085, 0.0
  %v2233 = vmax.f32 %v1575, 0.0
  %v2234 = vmax.f32 %v1577, 0.0
  %v2235 = vmax.f32 %v2089, 0.0
  %v2236 = vmax.f32 %v2091, 0.0
  %v2237 = vmax.f32 %v1581, 0.0
  %v2238 = vmax.f32 %v1583, 0.0
  %v2239 = vmax.f32 %v2095, 0.0
  %v2240 = vmax.f32 %v2097, 0.0
  %v2241 = vmax.f32 %v1587, 0.0
  %v2242 = vmax.f32 %v1589, 0.0
  %v2243 = vmax.f32 %v2101, 0.0
  %v2244 = vmax.f32 %v2103, 0.0
  %v2245 = vmax.f32 %v1593, 0.0
  %v2246 = vmax.f32 %v1595, 0.0
  %v2247 = vmax.f32 %v2107, 0.0
  %v2248 = vmax.f32 %v2109, 0.0
  %v2249 = vmax.f32 %v1599, 0.0
  %v2250 = vmax.f32 %v1601, 0.0
  %v2251 = vmax.f32 %v2113, 0.0
  %v2252 = vmax.f32 %v2115, 0.0
  %v2253 = vmax.f32 %v1605, 0.0
  %v2254 = vmax.f32 %v1607, 0.0
  %v2255 = vmax.f32 %v2119, 0.0
  %v2256 = vmax.f32 %v2121, 0.0
  %v2257 = vmax.f32 %v1611, 0.0
  %v2258 = vmax.f32 %v1613, 0.0
  %v2259 = vmax.f32 %v2125, 0.0
  %v2260 = vmax.f32 %v2127, 0.0
  %v2261 = vmax.f32 %v1617, 0.0
  %v2262 = vmax.f32 %v1619, 0.0
  %v2263 = vmax.f32 %v2131, 0.0
  %v2264 = vmax.f32 %v2133, 0.0
  %v2265 = vmax.f32 %v1623, 0.0
  %v2266 = vmax.f32 %v1625, 0.0
  %v2267 = vmax.f32 %v2137, 0.0
  %v2268 = vmax.f32 %v2139, 0.0
  %v2269 = vld [vmem:[%s5] sm:$0xff]
  %v2270 = vld [vmem:[%s5 + $0x8] sm:$0xff]
  %v2271 = vld [vmem:[%s5 + $0x10] sm:$0xff]
  %v2272 = vld [vmem:[%s5 + $0x18] sm:$0xff]
  %v2273 = vld [vmem:[%s5 + $0x20] sm:$0xff]
  %v2274 = vld [vmem:[%s5 + $0x28] sm:$0xff]
  %v2275 = vld [vmem:[%s5 + $0x30] sm:$0xff]
  %v2276 = vld [vmem:[%s5 + $0x38] sm:$0xff]
  %v2277 = vld [vmem:[%s5 + $0x40] sm:$0xff]
  %v2278 = vld [vmem:[%s5 + $0x48] sm:$0xff]
  %v2279 = vld [vmem:[%s5 + $0x50] sm:$0xff]
  %v2280 = vld [vmem:[%s5 + $0x58] sm:$0xff]
  %v2281 = vld [vmem:[%s5 + $0x60] sm:$0xff]
  %v2282 = vld [vmem:[%s5 + $0x68] sm:$0xff]
  %v2283 = vld [vmem:[%s5 + $0x70] sm:$0xff]
  %v2284 = vld [vmem:[%s5 + $0x78] sm:$0xff]
  %v2285 = vld [vmem:[%s5 + $0x80] sm:$0xff]
  %v2286 = vld [vmem:[%s5 + $0x88] sm:$0xff]
  %v2287 = vld [vmem:[%s5 + $0x90] sm:$0xff]
  %v2288 = vld [vmem:[%s5 + $0x98] sm:$0xff]
  %v2289 = vld [vmem:[%s5 + $0xa0] sm:$0xff]
  %v2290 = vld [vmem:[%s5 + $0xa8] sm:$0xff]
  %v2291 = vld [vmem:[%s5 + $0xb0] sm:$0xff]
  %v2292 = vld [vmem:[%s5 + $0xb8] sm:$0xff]
  %v2293 = vld [vmem:[%s5 + $0xc0] sm:$0xff]
  %v2294 = vld [vmem:[%s5 + $0xc8] sm:$0xff]
  %v2295 = vld [vmem:[%s5 + $0xd0] sm:$0xff]
  %v2296 = vld [vmem:[%s5 + $0xd8] sm:$0xff]
  %v2297 = vld [vmem:[%s5 + $0xe0] sm:$0xff]
  %v2298 = vld [vmem:[%s5 + $0xe8] sm:$0xff]
  %v2299 = vld [vmem:[%s5 + $0xf0] sm:$0xff]
  %v2300 = vld [vmem:[%s5 + $0xf8] sm:$0xff]
  %v2301 = vld [vmem:[%s5 + $0x100] sm:$0xff]
  %v2302 = vld [vmem:[%s5 + $0x108] sm:$0xff]
  %v2303 = vld [vmem:[%s5 + $0x110] sm:$0xff]
  %v2304 = vld [vmem:[%s5 + $0x118] sm:$0xff]
  %v2305 = vld [vmem:[%s5 + $0x120] sm:$0xff]
  %v2306 = vld [vmem:[%s5 + $0x128] sm:$0xff]
  %v2307 = vld [vmem:[%s5 + $0x130] sm:$0xff]
  %v2308 = vld [vmem:[%s5 + $0x138] sm:$0xff]
  %v2309 = vld [vmem:[%s5 + $0x140] sm:$0xff]
  %v2310 = vld [vmem:[%s5 + $0x148] sm:$0xff]
  %v2311 = vld [vmem:[%s5 + $0x150] sm:$0xff]
  %v2312 = vld [vmem:[%s5 + $0x158] sm:$0xff]
  %v2313 = vld [vmem:[%s5 + $0x160] sm:$0xff]
  %v2314 = vld [vmem:[%s5 + $0x168] sm:$0xff]
  %v2315 = vld [vmem:[%s5 + $0x170] sm:$0xff]
  %v2316 = vld [vmem:[%s5 + $0x178] sm:$0xff]
  %v2317 = vld [vmem:[%s5 + $0x180] sm:$0xff]
  %v2318 = vld [vmem:[%s5 + $0x188] sm:$0xff]
  %v2319 = vld [vmem:[%s5 + $0x190] sm:$0xff]
  %v2320 = vld [vmem:[%s5 + $0x198] sm:$0xff]
  %v2321 = vld [vmem:[%s5 + $0x1a0] sm:$0xff]
  %v2322 = vld [vmem:[%s5 + $0x1a8] sm:$0xff]
  %v2323 = vld [vmem:[%s5 + $0x1b0] sm:$0xff]
  %v2324 = vld [vmem:[%s5 + $0x1b8] sm:$0xff]
  %v2325 = vld [vmem:[%s5 + $0x1c0] sm:$0xff]
  %v2326 = vld [vmem:[%s5 + $0x1c8] sm:$0xff]
  %v2327 = vld [vmem:[%s5 + $0x1d0] sm:$0xff]
  %v2328 = vld [vmem:[%s5 + $0x1d8] sm:$0xff]
  %v2329 = vld [vmem:[%s5 + $0x1e0] sm:$0xff]
  %v2330 = vld [vmem:[%s5 + $0x1e8] sm:$0xff]
  %v2331 = vld [vmem:[%s5 + $0x1f0] sm:$0xff]
  %v2332 = vld [vmem:[%s5 + $0x1f8] sm:$0xff]
  %v2333 = vld [vmem:[%s6] sm:$0x1]
  %v2335 = vlaneseq
  %v2336 = vshrl.u32 %v2335, 7
  %v2337 = vsub.s32 0, %v2336
  %v2338 = vrot.slane %v2333, %v2337
  %2340 = vmatprep.subr.mxu0 0.0
  %2341 = vmatpush1.msra.mxu0 %v2269
  %2342 = vmatprep.subr.mxu0 0.0
  %2343 = vmatpush1.msra.mxu0 %v2270
  %2344 = vmatprep.subr.mxu0 0.0
  %2345 = vmatpush1.msra.mxu0 %v2271
  %2346 = vmatprep.subr.mxu0 0.0
  %2347 = vmatpush1.msra.mxu0 %v2272
  %2348 = vmatprep.subr.mxu0 0.0
  %2349 = vmatpush1.msra.mxu0 %v2273
  %2350 = vmatprep.subr.mxu0 0.0
  %2351 = vmatpush1.msra.mxu0 %v2274
  %2352 = vmatprep.subr.mxu0 0.0
  %2353 = vmatpush1.msra.mxu0 %v2275
  %2354 = vmatprep.subr.mxu0 0.0
  %2355 = vmatpush1.msra.mxu0 %v2276
  %2356 = vmatprep.subr.mxu0 0.0
  %2357 = vmatpush1.msra.mxu0 %v2277
  %2358 = vmatprep.subr.mxu0 0.0
  %2359 = vmatpush1.msra.mxu0 %v2278
  %2360 = vmatprep.subr.mxu0 0.0
  %2361 = vmatpush1.msra.mxu0 %v2279
  %2362 = vmatprep.subr.mxu0 0.0
  %2363 = vmatpush1.msra.mxu0 %v2280
  %2364 = vmatprep.subr.mxu0 0.0
  %2365 = vmatpush1.msra.mxu0 %v2281
  %2366 = vmatprep.subr.mxu0 0.0
  %2367 = vmatpush1.msra.mxu0 %v2282
  %2368 = vmatprep.subr.mxu0 0.0
  %2369 = vmatpush1.msra.mxu0 %v2283
  %2370 = vmatprep.subr.mxu0 0.0
  %2371 = vmatpush1.msra.mxu0 %v2284
  %2372 = vmatprep.subr.mxu0 0.0
  %2373 = vmatpush1.msra.mxu0 %v2285
  %2374 = vmatprep.subr.mxu0 0.0
  %2375 = vmatpush1.msra.mxu0 %v2286
  %2376 = vmatprep.subr.mxu0 0.0
  %2377 = vmatpush1.msra.mxu0 %v2287
  %2378 = vmatprep.subr.mxu0 0.0
  %2379 = vmatpush1.msra.mxu0 %v2288
  %2380 = vmatprep.subr.mxu0 0.0
  %2381 = vmatpush1.msra.mxu0 %v2289
  %2382 = vmatprep.subr.mxu0 0.0
  %2383 = vmatpush1.msra.mxu0 %v2290
  %2384 = vmatprep.subr.mxu0 0.0
  %2385 = vmatpush1.msra.mxu0 %v2291
  %2386 = vmatprep.subr.mxu0 0.0
  %2387 = vmatpush1.msra.mxu0 %v2292
  %2388 = vmatprep.subr.mxu0 0.0
  %2389 = vmatpush1.msra.mxu0 %v2293
  %2390 = vmatprep.subr.mxu0 0.0
  %2391 = vmatpush1.msra.mxu0 %v2294
  %2392 = vmatprep.subr.mxu0 0.0
  %2393 = vmatpush1.msra.mxu0 %v2295
  %2394 = vmatprep.subr.mxu0 0.0
  %2395 = vmatpush1.msra.mxu0 %v2296
  %2396 = vmatprep.subr.mxu0 0.0
  %2397 = vmatpush1.msra.mxu0 %v2297
  %2398 = vmatprep.subr.mxu0 0.0
  %2399 = vmatpush1.msra.mxu0 %v2298
  %2400 = vmatprep.subr.mxu0 0.0
  %2401 = vmatpush1.msra.mxu0 %v2299
  %2402 = vmatprep.subr.mxu0 0.0
  %2403 = vmatpush1.msra.mxu0 %v2300
  %2404 = vmatprep.mubr.f32.mxu0 %v2142
  %2405 = vmatmul.mubr.f32.gmra.mrb[0].mxu0 %v2141
  %v2406 = vpop.f32.mrb[0].mxu0
  %v2407 = vadd.f32 %v2338, %v2406
  %v2408 = vpop.f32.mrb[0].mxu0
  %2409 = vmatprep.mubr.f32.mxu0 %v2146
  %2410 = vmatmul.mubr.f32.gmra.mrb[0].mxu0 %v2145
  %v2411 = vpop.f32.mrb[0].mxu0
  %v2412 = vadd.f32 %v2338, %v2411
  %v2413 = vpop.f32.mrb[0].mxu0
  %2414 = vmatprep.mubr.f32.mxu0 %v2150
  %2415 = vmatmul.mubr.f32.gmra.mrb[0].mxu0 %v2149
  %v2416 = vpop.f32.mrb[0].mxu0
  %v2417 = vadd.f32 %v2338, %v2416
  %v2418 = vpop.f32.mrb[0].mxu0
  %2419 = vmatprep.mubr.f32.mxu0 %v2154
  %2420 = vmatmul.mubr.f32.gmra.mrb[0].mxu0 %v2153
  %v2421 = vpop.f32.mrb[0].mxu0
  %v2422 = vadd.f32 %v2338, %v2421
  %v2423 = vpop.f32.mrb[0].mxu0
  %2424 = vmatprep.mubr.f32.mxu0 %v2158
  %2425 = vmatmul.mubr.f32.gmra.mrb[0].mxu0 %v2157
  %v2426 = vpop.f32.mrb[0].mxu0
  %v2427 = vadd.f32 %v2338, %v2426
  %v2428 = vpop.f32.mrb[0].mxu0
  %2429 = vmatprep.mubr.f32.mxu0 %v2162
  %2430 = vmatmul.mubr.f32.gmra.mrb[0].mxu0 %v2161
  %v2431 = vpop.f32.mrb[0].mxu0
  %v2432 = vadd.f32 %v2338, %v2431
  %v2433 = vpop.f32.mrb[0].mxu0
  %2434 = vmatprep.mubr.f32.mxu0 %v2166
  %2435 = vmatmul.mubr.f32.gmra.mrb[0].mxu0 %v2165
  %v2436 = vpop.f32.mrb[0].mxu0
  %v2437 = vadd.f32 %v2338, %v2436
  %v2438 = vpop.f32.mrb[0].mxu0
  %2439 = vmatprep.mubr.f32.mxu0 %v2170
  %2440 = vmatmul.mubr.f32.gmra.mrb[0].mxu0 %v2169
  %v2441 = vpop.f32.mrb[0].mxu0
  %v2442 = vadd.f32 %v2338, %v2441
  %v2443 = vpop.f32.mrb[0].mxu0
  %2444 = vmatprep.mubr.f32.mxu0 %v2174
  %2445 = vmatmul.mubr.f32.gmra.mrb[0].mxu0 %v2173
  %v2446 = vpop.f32.mrb[0].mxu0
  %v2447 = vadd.f32 %v2338, %v2446
  %v2448 = vpop.f32.mrb[0].mxu0
  %2449 = vmatprep.mubr.f32.mxu0 %v2178
  %2450 = vmatmul.mubr.f32.gmra.mrb[0].mxu0 %v2177
  %v2451 = vpop.f32.mrb[0].mxu0
  %v2452 = vadd.f32 %v2338, %v2451
  %v2453 = vpop.f32.mrb[0].mxu0
  %2454 = vmatprep.mubr.f32.mxu0 %v2182
  %2455 = vmatmul.mubr.f32.gmra.mrb[0].mxu0 %v2181
  %v2456 = vpop.f32.mrb[0].mxu0
  %v2457 = vadd.f32 %v2338, %v2456
  %v2458 = vpop.f32.mrb[0].mxu0
  %2459 = vmatprep.mubr.f32.mxu0 %v2186
  %2460 = vmatmul.mubr.f32.gmra.mrb[0].mxu0 %v2185
  %v2461 = vpop.f32.mrb[0].mxu0
  %v2462 = vadd.f32 %v2338, %v2461
  %v2463 = vpop.f32.mrb[0].mxu0
  %2464 = vmatprep.mubr.f32.mxu0 %v2190
  %2465 = vmatmul.mubr.f32.gmra.mrb[0].mxu0 %v2189
  %v2466 = vpop.f32.mrb[0].mxu0
  %v2467 = vadd.f32 %v2338, %v2466
  %v2468 = vpop.f32.mrb[0].mxu0
  %2469 = vmatprep.mubr.f32.mxu0 %v2194
  %2470 = vmatmul.mubr.f32.gmra.mrb[0].mxu0 %v2193
  %v2471 = vpop.f32.mrb[0].mxu0
  %v2472 = vadd.f32 %v2338, %v2471
  %v2473 = vpop.f32.mrb[0].mxu0
  %2474 = vmatprep.mubr.f32.mxu0 %v2198
  %2475 = vmatmul.mubr.f32.gmra.mrb[0].mxu0 %v2197
  %v2476 = vpop.f32.mrb[0].mxu0
  %v2477 = vadd.f32 %v2338, %v2476
  %v2478 = vpop.f32.mrb[0].mxu0
  %2479 = vmatprep.mubr.f32.mxu0 %v2202
  %2480 = vmatmul.mubr.f32.gmra.mrb[0].mxu0 %v2201
  %v2481 = vpop.f32.mrb[0].mxu0
  %v2482 = vadd.f32 %v2338, %v2481
  %v2483 = vpop.f32.mrb[0].mxu0
  %2484 = vmatprep.mubr.f32.mxu0 %v2206
  %2485 = vmatmul.mubr.f32.gmra.mrb[0].mxu0 %v2205
  %v2486 = vpop.f32.mrb[0].mxu0
  %v2487 = vadd.f32 %v2338, %v2486
  %v2488 = vpop.f32.mrb[0].mxu0
  %2489 = vmatprep.mubr.f32.mxu0 %v2210
  %2490 = vmatmul.mubr.f32.gmra.mrb[0].mxu0 %v2209
  %v2491 = vpop.f32.mrb[0].mxu0
  %v2492 = vadd.f32 %v2338, %v2491
  %v2493 = vpop.f32.mrb[0].mxu0
  %2494 = vmatprep.mubr.f32.mxu0 %v2214
  %2495 = vmatmul.mubr.f32.gmra.mrb[0].mxu0 %v2213
  %v2496 = vpop.f32.mrb[0].mxu0
  %v2497 = vadd.f32 %v2338, %v2496
  %v2498 = vpop.f32.mrb[0].mxu0
  %2499 = vmatprep.mubr.f32.mxu0 %v2218
  %2500 = vmatmul.mubr.f32.gmra.mrb[0].mxu0 %v2217
  %v2501 = vpop.f32.mrb[0].mxu0
  %v2502 = vadd.f32 %v2338, %v2501
  %v2503 = vpop.f32.mrb[0].mxu0
  %2504 = vmatprep.mubr.f32.mxu0 %v2222
  %2505 = vmatmul.mubr.f32.gmra.mrb[0].mxu0 %v2221
  %v2506 = vpop.f32.mrb[0].mxu0
  %v2507 = vadd.f32 %v2338, %v2506
  %v2508 = vpop.f32.mrb[0].mxu0
  %2509 = vmatprep.mubr.f32.mxu0 %v2226
  %2510 = vmatmul.mubr.f32.gmra.mrb[0].mxu0 %v2225
  %v2511 = vpop.f32.mrb[0].mxu0
  %v2512 = vadd.f32 %v2338, %v2511
  %v2513 = vpop.f32.mrb[0].mxu0
  %2514 = vmatprep.mubr.f32.mxu0 %v2230
  %2515 = vmatmul.mubr.f32.gmra.mrb[0].mxu0 %v2229
  %v2516 = vpop.f32.mrb[0].mxu0
  %v2517 = vadd.f32 %v2338, %v2516
  %v2518 = vpop.f32.mrb[0].mxu0
  %2519 = vmatprep.mubr.f32.mxu0 %v2234
  %2520 = vmatmul.mubr.f32.gmra.mrb[0].mxu0 %v2233
  %v2521 = vpop.f32.mrb[0].mxu0
  %v2522 = vadd.f32 %v2338, %v2521
  %v2523 = vpop.f32.mrb[0].mxu0
  %2524 = vmatprep.mubr.f32.mxu0 %v2238
  %2525 = vmatmul.mubr.f32.gmra.mrb[0].mxu0 %v2237
  %v2526 = vpop.f32.mrb[0].mxu0
  %v2527 = vadd.f32 %v2338, %v2526
  %v2528 = vpop.f32.mrb[0].mxu0
  %2529 = vmatprep.mubr.f32.mxu0 %v2242
  %2530 = vmatmul.mubr.f32.gmra.mrb[0].mxu0 %v2241
  %v2531 = vpop.f32.mrb[0].mxu0
  %v2532 = vadd.f32 %v2338, %v2531
  %v2533 = vpop.f32.mrb[0].mxu0
  %2534 = vmatprep.mubr.f32.mxu0 %v2246
  %2535 = vmatmul.mubr.f32.gmra.mrb[0].mxu0 %v2245
  %v2536 = vpop.f32.mrb[0].mxu0
  %v2537 = vadd.f32 %v2338, %v2536
  %v2538 = vpop.f32.mrb[0].mxu0
  %2539 = vmatprep.mubr.f32.mxu0 %v2250
  %2540 = vmatmul.mubr.f32.gmra.mrb[0].mxu0 %v2249
  %v2541 = vpop.f32.mrb[0].mxu0
  %v2542 = vadd.f32 %v2338, %v2541
  %v2543 = vpop.f32.mrb[0].mxu0
  %2544 = vmatprep.mubr.f32.mxu0 %v2254
  %2545 = vmatmul.mubr.f32.gmra.mrb[0].mxu0 %v2253
  %v2546 = vpop.f32.mrb[0].mxu0
  %v2547 = vadd.f32 %v2338, %v2546
  %v2548 = vpop.f32.mrb[0].mxu0
  %2549 = vmatprep.mubr.f32.mxu0 %v2258
  %2550 = vmatmul.mubr.f32.gmra.mrb[0].mxu0 %v2257
  %v2551 = vpop.f32.mrb[0].mxu0
  %v2552 = vadd.f32 %v2338, %v2551
  %v2553 = vpop.f32.mrb[0].mxu0
  %2554 = vmatprep.mubr.f32.mxu0 %v2262
  %2555 = vmatmul.mubr.f32.gmra.mrb[0].mxu0 %v2261
  %v2556 = vpop.f32.mrb[0].mxu0
  %v2557 = vadd.f32 %v2338, %v2556
  %v2558 = vpop.f32.mrb[0].mxu0
  %2559 = vmatprep.mubr.f32.mxu0 %v2266
  %2560 = vmatmul.mubr.f32.gmra.mrb[0].mxu0 %v2265
  %v2561 = vpop.f32.mrb[0].mxu0
  %v2562 = vadd.f32 %v2338, %v2561
  %v2563 = vpop.f32.mrb[0].mxu0
  %2564 = vdwg.mxu0
  %2565 = vmatprep.subr.mxu0 0.0
  %2566 = vmatpush1.msra.mxu0 %v2301
  %2567 = vmatprep.subr.mxu0 0.0
  %2568 = vmatpush1.msra.mxu0 %v2302
  %2569 = vmatprep.subr.mxu0 0.0
  %2570 = vmatpush1.msra.mxu0 %v2303
  %2571 = vmatprep.subr.mxu0 0.0
  %2572 = vmatpush1.msra.mxu0 %v2304
  %2573 = vmatprep.subr.mxu0 0.0
  %2574 = vmatpush1.msra.mxu0 %v2305
  %2575 = vmatprep.subr.mxu0 0.0
  %2576 = vmatpush1.msra.mxu0 %v2306
  %2577 = vmatprep.subr.mxu0 0.0
  %2578 = vmatpush1.msra.mxu0 %v2307
  %2579 = vmatprep.subr.mxu0 0.0
  %2580 = vmatpush1.msra.mxu0 %v2308
  %2581 = vmatprep.subr.mxu0 0.0
  %2582 = vmatpush1.msra.mxu0 %v2309
  %2583 = vmatprep.subr.mxu0 0.0
  %2584 = vmatpush1.msra.mxu0 %v2310
  %2585 = vmatprep.subr.mxu0 0.0
  %2586 = vmatpush1.msra.mxu0 %v2311
  %2587 = vmatprep.subr.mxu0 0.0
  %2588 = vmatpush1.msra.mxu0 %v2312
  %2589 = vmatprep.subr.mxu0 0.0
  %2590 = vmatpush1.msra.mxu0 %v2313
  %2591 = vmatprep.subr.mxu0 0.0
  %2592 = vmatpush1.msra.mxu0 %v2314
  %2593 = vmatprep.subr.mxu0 0.0
  %2594 = vmatpush1.msra.mxu0 %v2315
  %2595 = vmatprep.subr.mxu0 0.0
  %2596 = vmatpush1.msra.mxu0 %v2316
  %2597 = vmatprep.subr.mxu0 0.0
  %2598 = vmatpush1.msra.mxu0 %v2317
  %2599 = vmatprep.subr.mxu0 0.0
  %2600 = vmatpush1.msra.mxu0 %v2318
  %2601 = vmatprep.subr.mxu0 0.0
  %2602 = vmatpush1.msra.mxu0 %v2319
  %2603 = vmatprep.subr.mxu0 0.0
  %2604 = vmatpush1.msra.mxu0 %v2320
  %2605 = vmatprep.subr.mxu0 0.0
  %2606 = vmatpush1.msra.mxu0 %v2321
  %2607 = vmatprep.subr.mxu0 0.0
  %2608 = vmatpush1.msra.mxu0 %v2322
  %2609 = vmatprep.subr.mxu0 0.0
  %2610 = vmatpush1.msra.mxu0 %v2323
  %2611 = vmatprep.subr.mxu0 0.0
  %2612 = vmatpush1.msra.mxu0 %v2324
  %2613 = vmatprep.subr.mxu0 0.0
  %2614 = vmatpush1.msra.mxu0 %v2325
  %2615 = vmatprep.subr.mxu0 0.0
  %2616 = vmatpush1.msra.mxu0 %v2326
  %2617 = vmatprep.subr.mxu0 0.0
  %2618 = vmatpush1.msra.mxu0 %v2327
  %2619 = vmatprep.subr.mxu0 0.0
  %2620 = vmatpush1.msra.mxu0 %v2328
  %2621 = vmatprep.subr.mxu0 0.0
  %2622 = vmatpush1.msra.mxu0 %v2329
  %2623 = vmatprep.subr.mxu0 0.0
  %2624 = vmatpush1.msra.mxu0 %v2330
  %2625 = vmatprep.subr.mxu0 0.0
  %2626 = vmatpush1.msra.mxu0 %v2331
  %2627 = vmatprep.subr.mxu0 0.0
  %2628 = vmatpush1.msra.mxu0 %v2332
  %2629 = vmatprep.mubr.f32.mxu0 %v2144
  %2630 = vmatmul.mubr.f32.gmra.mrb[0].mxu0 %v2143
  %v2631 = vpop.f32.mrb[0].mxu0
  %v2632 = vadd.f32 %v2407, %v2631
  %v2633 = vpop.f32.mrb[0].mxu0
  %2634 = vmatprep.mubr.f32.mxu0 %v2148
  %2635 = vmatmul.mubr.f32.gmra.mrb[0].mxu0 %v2147
  %v2636 = vpop.f32.mrb[0].mxu0
  %v2637 = vadd.f32 %v2412, %v2636
  %v2638 = vpop.f32.mrb[0].mxu0
  %2639 = vmatprep.mubr.f32.mxu0 %v2152
  %2640 = vmatmul.mubr.f32.gmra.mrb[0].mxu0 %v2151
  %v2641 = vpop.f32.mrb[0].mxu0
  %v2642 = vadd.f32 %v2417, %v2641
  %v2643 = vpop.f32.mrb[0].mxu0
  %2644 = vmatprep.mubr.f32.mxu0 %v2156
  %2645 = vmatmul.mubr.f32.gmra.mrb[0].mxu0 %v2155
  %v2646 = vpop.f32.mrb[0].mxu0
  %v2647 = vadd.f32 %v2422, %v2646
  %v2648 = vpop.f32.mrb[0].mxu0
  %2649 = vmatprep.mubr.f32.mxu0 %v2160
  %2650 = vmatmul.mubr.f32.gmra.mrb[0].mxu0 %v2159
  %v2651 = vpop.f32.mrb[0].mxu0
  %v2652 = vadd.f32 %v2427, %v2651
  %v2653 = vpop.f32.mrb[0].mxu0
  %2654 = vmatprep.mubr.f32.mxu0 %v2164
  %2655 = vmatmul.mubr.f32.gmra.mrb[0].mxu0 %v2163
  %v2656 = vpop.f32.mrb[0].mxu0
  %v2657 = vadd.f32 %v2432, %v2656
  %v2658 = vpop.f32.mrb[0].mxu0
  %2659 = vmatprep.mubr.f32.mxu0 %v2168
  %2660 = vmatmul.mubr.f32.gmra.mrb[0].mxu0 %v2167
  %v2661 = vpop.f32.mrb[0].mxu0
  %v2662 = vadd.f32 %v2437, %v2661
  %v2663 = vpop.f32.mrb[0].mxu0
  %2664 = vmatprep.mubr.f32.mxu0 %v2172
  %2665 = vmatmul.mubr.f32.gmra.mrb[0].mxu0 %v2171
  %v2666 = vpop.f32.mrb[0].mxu0
  %v2667 = vadd.f32 %v2442, %v2666
  %v2668 = vpop.f32.mrb[0].mxu0
  %2669 = vmatprep.mubr.f32.mxu0 %v2176
  %2670 = vmatmul.mubr.f32.gmra.mrb[0].mxu0 %v2175
  %v2671 = vpop.f32.mrb[0].mxu0
  %v2672 = vadd.f32 %v2447, %v2671
  %v2673 = vpop.f32.mrb[0].mxu0
  %2674 = vmatprep.mubr.f32.mxu0 %v2180
  %2675 = vmatmul.mubr.f32.gmra.mrb[0].mxu0 %v2179
  %v2676 = vpop.f32.mrb[0].mxu0
  %v2677 = vadd.f32 %v2452, %v2676
  %v2678 = vpop.f32.mrb[0].mxu0
  %2679 = vmatprep.mubr.f32.mxu0 %v2184
  %2680 = vmatmul.mubr.f32.gmra.mrb[0].mxu0 %v2183
  %v2681 = vpop.f32.mrb[0].mxu0
  %v2682 = vadd.f32 %v2457, %v2681
  %v2683 = vpop.f32.mrb[0].mxu0
  %2684 = vmatprep.mubr.f32.mxu0 %v2188
  %2685 = vmatmul.mubr.f32.gmra.mrb[0].mxu0 %v2187
  %v2686 = vpop.f32.mrb[0].mxu0
  %v2687 = vadd.f32 %v2462, %v2686
  %v2688 = vpop.f32.mrb[0].mxu0
  %2689 = vmatprep.mubr.f32.mxu0 %v2192
  %2690 = vmatmul.mubr.f32.gmra.mrb[0].mxu0 %v2191
  %v2691 = vpop.f32.mrb[0].mxu0
  %v2692 = vadd.f32 %v2467, %v2691
  %v2693 = vpop.f32.mrb[0].mxu0
  %2694 = vmatprep.mubr.f32.mxu0 %v2196
  %2695 = vmatmul.mubr.f32.gmra.mrb[0].mxu0 %v2195
  %v2696 = vpop.f32.mrb[0].mxu0
  %v2697 = vadd.f32 %v2472, %v2696
  %v2698 = vpop.f32.mrb[0].mxu0
  %2699 = vmatprep.mubr.f32.mxu0 %v2200
  %2700 = vmatmul.mubr.f32.gmra.mrb[0].mxu0 %v2199
  %v2701 = vpop.f32.mrb[0].mxu0
  %v2702 = vadd.f32 %v2477, %v2701
  %v2703 = vpop.f32.mrb[0].mxu0
  %2704 = vmatprep.mubr.f32.mxu0 %v2204
  %2705 = vmatmul.mubr.f32.gmra.mrb[0].mxu0 %v2203
  %v2706 = vpop.f32.mrb[0].mxu0
  %v2707 = vadd.f32 %v2482, %v2706
  %v2708 = vpop.f32.mrb[0].mxu0
  %2709 = vmatprep.mubr.f32.mxu0 %v2208
  %2710 = vmatmul.mubr.f32.gmra.mrb[0].mxu0 %v2207
  %v2711 = vpop.f32.mrb[0].mxu0
  %v2712 = vadd.f32 %v2487, %v2711
  %v2713 = vpop.f32.mrb[0].mxu0
  %2714 = vmatprep.mubr.f32.mxu0 %v2212
  %2715 = vmatmul.mubr.f32.gmra.mrb[0].mxu0 %v2211
  %v2716 = vpop.f32.mrb[0].mxu0
  %v2717 = vadd.f32 %v2492, %v2716
  %v2718 = vpop.f32.mrb[0].mxu0
  %2719 = vmatprep.mubr.f32.mxu0 %v2216
  %2720 = vmatmul.mubr.f32.gmra.mrb[0].mxu0 %v2215
  %v2721 = vpop.f32.mrb[0].mxu0
  %v2722 = vadd.f32 %v2497, %v2721
  %v2723 = vpop.f32.mrb[0].mxu0
  %2724 = vmatprep.mubr.f32.mxu0 %v2220
  %2725 = vmatmul.mubr.f32.gmra.mrb[0].mxu0 %v2219
  %v2726 = vpop.f32.mrb[0].mxu0
  %v2727 = vadd.f32 %v2502, %v2726
  %v2728 = vpop.f32.mrb[0].mxu0
  %2729 = vmatprep.mubr.f32.mxu0 %v2224
  %2730 = vmatmul.mubr.f32.gmra.mrb[0].mxu0 %v2223
  %v2731 = vpop.f32.mrb[0].mxu0
  %v2732 = vadd.f32 %v2507, %v2731
  %v2733 = vpop.f32.mrb[0].mxu0
  %2734 = vmatprep.mubr.f32.mxu0 %v2228
  %2735 = vmatmul.mubr.f32.gmra.mrb[0].mxu0 %v2227
  %v2736 = vpop.f32.mrb[0].mxu0
  %v2737 = vadd.f32 %v2512, %v2736
  %v2738 = vpop.f32.mrb[0].mxu0
  %2739 = vmatprep.mubr.f32.mxu0 %v2232
  %2740 = vmatmul.mubr.f32.gmra.mrb[0].mxu0 %v2231
  %v2741 = vpop.f32.mrb[0].mxu0
  %v2742 = vadd.f32 %v2517, %v2741
  %v2743 = vpop.f32.mrb[0].mxu0
  %2744 = vmatprep.mubr.f32.mxu0 %v2236
  %2745 = vmatmul.mubr.f32.gmra.mrb[0].mxu0 %v2235
  %v2746 = vpop.f32.mrb[0].mxu0
  %v2747 = vadd.f32 %v2522, %v2746
  %v2748 = vpop.f32.mrb[0].mxu0
  %2749 = vmatprep.mubr.f32.mxu0 %v2240
  %2750 = vmatmul.mubr.f32.gmra.mrb[0].mxu0 %v2239
  %v2751 = vpop.f32.mrb[0].mxu0
  %v2752 = vadd.f32 %v2527, %v2751
  %v2753 = vpop.f32.mrb[0].mxu0
  %2754 = vmatprep.mubr.f32.mxu0 %v2244
  %2755 = vmatmul.mubr.f32.gmra.mrb[0].mxu0 %v2243
  %v2756 = vpop.f32.mrb[0].mxu0
  %v2757 = vadd.f32 %v2532, %v2756
  %v2758 = vpop.f32.mrb[0].mxu0
  %2759 = vmatprep.mubr.f32.mxu0 %v2248
  %2760 = vmatmul.mubr.f32.gmra.mrb[0].mxu0 %v2247
  %v2761 = vpop.f32.mrb[0].mxu0
  %v2762 = vadd.f32 %v2537, %v2761
  %v2763 = vpop.f32.mrb[0].mxu0
  %2764 = vmatprep.mubr.f32.mxu0 %v2252
  %2765 = vmatmul.mubr.f32.gmra.mrb[0].mxu0 %v2251
  %v2766 = vpop.f32.mrb[0].mxu0
  %v2767 = vadd.f32 %v2542, %v2766
  %v2768 = vpop.f32.mrb[0].mxu0
  %2769 = vmatprep.mubr.f32.mxu0 %v2256
  %2770 = vmatmul.mubr.f32.gmra.mrb[0].mxu0 %v2255
  %v2771 = vpop.f32.mrb[0].mxu0
  %v2772 = vadd.f32 %v2547, %v2771
  %v2773 = vpop.f32.mrb[0].mxu0
  %2774 = vmatprep.mubr.f32.mxu0 %v2260
  %2775 = vmatmul.mubr.f32.gmra.mrb[0].mxu0 %v2259
  %v2776 = vpop.f32.mrb[0].mxu0
  %v2777 = vadd.f32 %v2552, %v2776
  %v2778 = vpop.f32.mrb[0].mxu0
  %2779 = vmatprep.mubr.f32.mxu0 %v2264
  %2780 = vmatmul.mubr.f32.gmra.mrb[0].mxu0 %v2263
  %v2781 = vpop.f32.mrb[0].mxu0
  %v2782 = vadd.f32 %v2557, %v2781
  %v2783 = vpop.f32.mrb[0].mxu0
  %2784 = vmatprep.mubr.f32.mxu0 %v2268
  %2785 = vmatmul.mubr.f32.gmra.mrb[0].mxu0 %v2267
  %v2786 = vpop.f32.mrb[0].mxu0
  %v2787 = vadd.f32 %v2562, %v2786
  %v2788 = vpop.f32.mrb[0].mxu0
  %2789 = vdwg.mxu0
  %2790 = vst [vmem:[%s7] sm:$0xff] %v2632
  %2791 = vst [vmem:[%s7 + $0x8] sm:$0xff] %v2637
  %2792 = vst [vmem:[%s7 + $0x10] sm:$0xff] %v2642
  %2793 = vst [vmem:[%s7 + $0x18] sm:$0xff] %v2647
  %2794 = vst [vmem:[%s7 + $0x20] sm:$0xff] %v2652
  %2795 = vst [vmem:[%s7 + $0x28] sm:$0xff] %v2657
  %2796 = vst [vmem:[%s7 + $0x30] sm:$0xff] %v2662
  %2797 = vst [vmem:[%s7 + $0x38] sm:$0xff] %v2667
  %2798 = vst [vmem:[%s7 + $0x40] sm:$0xff] %v2672
  %2799 = vst [vmem:[%s7 + $0x48] sm:$0xff] %v2677
  %2800 = vst [vmem:[%s7 + $0x50] sm:$0xff] %v2682
  %2801 = vst [vmem:[%s7 + $0x58] sm:$0xff] %v2687
  %2802 = vst [vmem:[%s7 + $0x60] sm:$0xff] %v2692
  %2803 = vst [vmem:[%s7 + $0x68] sm:$0xff] %v2697
  %2804 = vst [vmem:[%s7 + $0x70] sm:$0xff] %v2702
  %2805 = vst [vmem:[%s7 + $0x78] sm:$0xff] %v2707
  %2806 = vst [vmem:[%s7 + $0x80] sm:$0xff] %v2712
  %2807 = vst [vmem:[%s7 + $0x88] sm:$0xff] %v2717
  %2808 = vst [vmem:[%s7 + $0x90] sm:$0xff] %v2722
  %2809 = vst [vmem:[%s7 + $0x98] sm:$0xff] %v2727
  %2810 = vst [vmem:[%s7 + $0xa0] sm:$0xff] %v2732
  %2811 = vst [vmem:[%s7 + $0xa8] sm:$0xff] %v2737
  %2812 = vst [vmem:[%s7 + $0xb0] sm:$0xff] %v2742
  %2813 = vst [vmem:[%s7 + $0xb8] sm:$0xff] %v2747
  %2814 = vst [vmem:[%s7 + $0xc0] sm:$0xff] %v2752
  %2815 = vst [vmem:[%s7 + $0xc8] sm:$0xff] %v2757
  %2816 = vst [vmem:[%s7 + $0xd0] sm:$0xff] %v2762
  %2817 = vst [vmem:[%s7 + $0xd8] sm:$0xff] %v2767
  %2818 = vst [vmem:[%s7 + $0xe0] sm:$0xff] %v2772
  %2819 = vst [vmem:[%s7 + $0xe8] sm:$0xff] %v2777
  %2820 = vst [vmem:[%s7 + $0xf0] sm:$0xff] %v2782
  %2821 = vst [vmem:[%s7 + $0xf8] sm:$0xff] %v2787
  // Predicated region
  $region30: #{critic_forward.1} parent=0 // pred_check
    _
  $region31: #{critic_forward.1} parent=0 // pred_check_branch
    %2823 = sbr.rel (0) target = $region33
  $region32: #{critic_forward.1} parent=0 // pred_region
    _
  $region33: #{critic_forward.1} parent=0 // pred_fallthru
    _
  // Predicated region
  $region34: #{critic_forward.1} parent=0 // pred_check
    _
  $region35: #{critic_forward.1} parent=0 // pred_check_branch
    %2825 = sbr.rel (0) target = $region37
  $region36: #{critic_forward.1} parent=0 // pred_region
    _
  $region37: #{critic_forward.1} parent=0 // pred_fallthru
    _

</llo_original>
